<compile_context>
chip_gen: v7x
topology: tpu7x:2x2x1
jax: 0.10.0
libtpu: 0.0.40
codegen_flags: <defaults>
</compile_context>

<pallas_src>
import functools

import numpy as np
import jax
import jax.numpy as jnp
from jax.experimental import pallas as pl
from jax.experimental.pallas import tpu as pltpu

BN_EPS = 1e-5
LEAKY_SLOPE = 0.2
SUBLANE = 8
# MXU (conv GEMM) operands run in bf16 with f32 accumulation per the perf
# review; all BN / LeakyReLU math is f32.  Set to jnp.float32 for bit-closer
# agreement with the f32 reference (tolerance 1e-3 instead of 4e-2).
MXU_DTYPE = jnp.bfloat16


def _round_up(x, m):
    return (x + m - 1) // m * m


# ----------------------------------------------------------------------------
# Pallas kernel: the whole 2-stage encoder, fully VMEM resident.
# ----------------------------------------------------------------------------
def _fused_encoder_kernel(inv_n1, inv_n2, tap_offsets,
                          lhs1_ref, w1_ref, g1_ref, b1_ref, m1_ref,
                          w2_ref, g2_ref, b2_ref, m2_ref,
                          out_ref, canvas_ref, lhs2_ref):
    # lhs1_ref : (4*Rs, 16*C0) stage-1 GEMM LHS, phase-major over the padded
    #                          stage-2 block grid (pad/tail rows are zero)
    # w1_ref   : (16*C0, C1)   packed stage-1 weights (taps folded into K)
    # w2_ref   : (16*C1, C2)   packed stage-2 weights
    # g*/b*    : (1, C)        BN affine params
    # m1_ref   : (4*Rs, 1)     1.0 where the row is a real stage-1 output pixel
    # m2_ref   : (R2, 1)       1.0 where the row is a real stage-2 output pixel
    # out_ref  : (R2, C2)
    # canvas_ref : (Rs, 4*C1)  f32 scratch: stage-1 activations in
    #                          space-to-depth (phase-in-lanes) layout
    # lhs2_ref : (R2, 16*C1)   scratch: stage-2 GEMM LHS
    c1 = w1_ref.shape[1]
    rs = canvas_ref.shape[0]
    kc = canvas_ref.shape[1]          # 4*C1
    r2 = out_ref.shape[0]

    # ---------------- stage 1: 3x3/s2 conv as ONE GEMM (K = 16*C0) -----------
    acc = jnp.dot(lhs1_ref[...], w1_ref[...], preferred_element_type=jnp.float32)

    m = m1_ref[...]                                             # (4*Rs, 1)
    mean = jnp.sum(acc * m, axis=0, keepdims=True) * inv_n1     # (1, C1)
    d = acc - mean                                              # reused below
    cent = d * m
    var = jnp.sum(cent * cent, axis=0, keepdims=True) * inv_n1  # biased var
    y = d * (g1_ref[...] * jax.lax.rsqrt(var + BN_EPS)) + b1_ref[...]
    y = jnp.where(y > 0, y, LEAKY_SLOPE * y)
    # Force pad-grid / seam / tail rows to exactly 0 (= stage-2 zero padding).
    y = y * m

    # Stash the 4 phase slabs as lane slabs of the canvas: canvas row = stage-2
    # input block (n, a, b); lanes = (ph, pw, c).
    for p in range(4):
        canvas_ref[:, p * c1:(p + 1) * c1] = y[p * rs:(p + 1) * rs, :]

    # ---------------- stage 2: assemble LHS + ONE GEMM (K = 16*C1) -----------
    # The 4 taps of the equivalent stride-1 2x2 conv are contiguous row-shifted
    # slices of the canvas; place them side by side along lanes in VMEM scratch.
    for t, off in enumerate(tap_offsets):
        lhs2_ref[:, t * kc:(t + 1) * kc] = (
            canvas_ref[pl.ds(off, r2), :].astype(MXU_DTYPE))

    acc2 = jnp.dot(lhs2_ref[...], w2_ref[...], preferred_element_type=jnp.float32)

    m2 = m2_ref[...]
    mean2 = jnp.sum(acc2 * m2, axis=0, keepdims=True) * inv_n2
    d2 = acc2 - mean2
    cent2 = d2 * m2
    var2 = jnp.sum(cent2 * cent2, axis=0, keepdims=True) * inv_n2
    y2 = d2 * (g2_ref[...] * jax.lax.rsqrt(var2 + BN_EPS)) + b2_ref[...]
    out_ref[...] = jnp.where(y2 > 0, y2, LEAKY_SLOPE * y2)


def _fused_call(lhs1, w1, g1, b1, m1, w2, g2, b2, m2, *, rs, r2, gb, n1, n2):
    c1 = w1.shape[1]
    c2 = w2.shape[1]
    kernel = functools.partial(_fused_encoder_kernel,
                               1.0 / float(n1), 1.0 / float(n2),
                               (0, 1, gb, gb + 1))       # (bh, bw) -> bh*gb + bw
    return pl.pallas_call(
        kernel,
        out_shape=jax.ShapeDtypeStruct((r2, c2), jnp.float32),
        in_specs=[pl.BlockSpec(memory_space=pltpu.MemorySpace.VMEM)] * 9,
        out_specs=pl.BlockSpec(memory_space=pltpu.MemorySpace.VMEM),
        scratch_shapes=[pltpu.VMEM((rs, 4 * c1), jnp.float32),
                        pltpu.VMEM((r2, 16 * c1), MXU_DTYPE)],
    )(lhs1, w1, g1, b1, m1, w2, g2, b2, m2)


# ----------------------------------------------------------------------------
# One-time parameter repacking (hoisted out of the forward path).
# ----------------------------------------------------------------------------
def _pack_weight(w, dtype):
    """(Cout, Cin, 3, 3) conv weight -> (16*Cin, Cout) single-GEMM matrix.

    Column layout = (bh, bw, ph, pw, ci): tap (bh, bw) of the equivalent
    stride-1 2x2 conv over the space-to-depth input, intra-block phase
    (ph, pw).  Original kernel offsets map via di = 2*bh + ph - 1,
    dj = 2*bw + pw - 1; slots with di or dj == -1 stay zero.
    """
    w = np.asarray(w, np.float32)
    cout, cin = w.shape[0], w.shape[1]
    packed = np.zeros((2, 2, 2, 2, cin, cout), np.float32)   # [bh,bw,ph,pw,ci,co]
    for bh in range(2):
        for ph in range(2):
            di = 2 * bh + ph - 1
            if not 0 <= di <= 2:
                continue
            for bw in range(2):
                for pw in range(2):
                    dj = 2 * bw + pw - 1
                    if not 0 <= dj <= 2:
                        continue
                    packed[bh, bw, ph, pw] = w[:, :, di, dj].T
    return jnp.asarray(packed.reshape(16 * cin, cout), dtype)


def prepare_params(params):
    """Call once; conv bias is dropped (cancels under training-mode BN)."""
    packed = []
    for p in params:
        packed.append(dict(
            w=_pack_weight(p["weight"], MXU_DTYPE),
            gamma=jnp.asarray(p["gamma"], jnp.float32).reshape(1, -1),
            beta=jnp.asarray(p["beta"], jnp.float32).reshape(1, -1),
        ))
    return packed


# ----------------------------------------------------------------------------
# Encoder forward (conv method): one pallas_call for the whole network.
# ----------------------------------------------------------------------------
@jax.jit
def encoder_forward(x, packed):
    """x: (N, C0, H, W) float32 (NCHW).  packed: output of prepare_params."""
    assert len(packed) == 2, "fused kernel is specialized to 2 conv stages"
    n, c0, h, w = x.shape
    assert h % 4 == 0 and w % 4 == 0, "two stride-2 stages need H, W % 4 == 0"
    c1 = packed[0]["w"].shape[1]
    c2 = packed[1]["w"].shape[1]
    assert packed[0]["w"].shape[0] == 16 * c0
    assert packed[1]["w"].shape[0] == 16 * c1

    p1, q1 = h // 2, w // 2            # stage-1 output spatial
    p2, q2 = p1 // 2, q1 // 2          # stage-2 output spatial
    ga, gb = p2 + 1, q2 + 1            # padded stage-2 block grid
    r_real = n * ga * gb               # real canvas rows
    r2 = _round_up(r_real, SUBLANE)            # rows stage 2 computes
    rs = _round_up(r2 + gb + 1, SUBLANE)       # canvas rows (tap-read headroom)

    # --- entry layout (XLA, one pass over the tiny input): stage-1 GEMM LHS ---
    # Row order: stage-1-output-pixel phase (ph, pw) major, then the padded
    # stage-2 block grid (n, a, b); pad blocks (a==0 or b==0) and tail rows are
    # zero.  Columns: (tap bh,bw | phase ph0,pw0 | ci), K = 16*C0.
    a = jnp.transpose(x, (0, 2, 3, 1))                          # NCHW -> NHWC
    ap = jnp.pad(a, ((0, 0), (2, 0), (2, 0), (0, 0)))
    s = ap.reshape(n, p1 + 1, 2, q1 + 1, 2, c0).transpose(0, 1, 3, 2, 4, 5)
    s = s.reshape(n, p1 + 1, q1 + 1, 4 * c0)
    lhs = jnp.concatenate(
        [s[:, bh:bh + p1, bw:bw + q1, :] for bh in (0, 1) for bw in (0, 1)],
        axis=-1)                                                # (n,p1,q1,16*c0)
    lhs = lhs.reshape(n, p2, 2, q2, 2, 16 * c0).transpose(2, 4, 0, 1, 3, 5)
    lhs = jnp.pad(lhs, ((0, 0), (0, 0), (0, 0), (1, 0), (1, 0), (0, 0)))
    lhs = lhs.reshape(4, r_real, 16 * c0)
    lhs = jnp.pad(lhs, ((0, 0), (0, rs - r_real), (0, 0)))
    lhs1 = lhs.reshape(4 * rs, 16 * c0).astype(MXU_DTYPE)

    # --- BN validity masks (trace-time constants) ---
    j = np.arange(rs)
    blk_a, blk_b = (j // gb) % ga, j % gb
    valid1 = (j < r_real) & (blk_a >= 1) & (blk_b >= 1)
    m1 = jnp.asarray(np.tile(valid1.astype(np.float32), 4).reshape(4 * rs, 1))
    j2 = np.arange(r2)
    out_a, out_b = (j2 // gb) % ga, j2 % gb
    valid2 = (j2 < r_real) & (out_a < p2) & (out_b < q2)
    m2 = jnp.asarray(valid2.astype(np.float32).reshape(r2, 1))

    y = _fused_call(lhs1,
                    packed[0]["w"], packed[0]["gamma"], packed[0]["beta"], m1,
                    packed[1]["w"], packed[1]["gamma"], packed[1]["beta"], m2,
                    rs=rs, r2=r2, gb=gb, n1=n * p1 * q1, n2=n * p2 * q2)

    # --- exit layout: drop seam/tail rows, NHWC -> NCHW (tiny, one XLA pass) --
    y = y[:r_real].reshape(n, ga, gb, c2)[:, :p2, :q2, :]
    return jnp.transpose(y, (0, 3, 1, 2))


# ----------------------------------------------------------------------------
# Pure-JAX f32 reference (faithful to PyTorch, incl. the conv bias).
# ----------------------------------------------------------------------------
def encoder_reference(x, params):
    for p in params:
        y = jax.lax.conv_general_dilated(
            x, p["weight"], window_strides=(2, 2),
            padding=((1, 1), (1, 1)),
            dimension_numbers=("NCHW", "OIHW", "NCHW"))
        y = y + p["bias"][None, :, None, None]
        mean = y.mean(axis=(0, 2, 3), keepdims=True)
        var = ((y - mean) ** 2).mean(axis=(0, 2, 3), keepdims=True)
        y = (p["gamma"][None, :, None, None] * (y - mean)
             / jnp.sqrt(var + BN_EPS) + p["beta"][None, :, None, None])
        x = jnp.where(y > 0, y, LEAKY_SLOPE * y)
    return x


# ----------------------------------------------------------------------------
# Deterministic synthetic parameters (nn.Conv2d / nn.BatchNorm2d shapes).
# ----------------------------------------------------------------------------
def init_params(key, channels):
    params = []
    for i in range(len(channels) - 1):
        cin, cout = channels[i], channels[i + 1]
        key, kw, kb, kg, kbt = jax.random.split(key, 5)
        fan_in = cin * 9
        w = jax.random.normal(kw, (cout, cin, 3, 3), jnp.float32) / jnp.sqrt(fan_in)
        b = 0.1 * jax.random.normal(kb, (cout,), jnp.float32)   # reference only
        gamma = 1.0 + 0.1 * jax.random.normal(kg, (cout,), jnp.float32)
        beta = 0.1 * jax.random.normal(kbt, (cout,), jnp.float32)
        params.append({"weight": w, "bias": b, "gamma": gamma, "beta": beta})
    return params


if __name__ == "__main__":
    # Module config: conf.method='conv', conf.spatial=16, channels=[2, 8, 16]
    # => spatial 16 -> 8 -> 4.
    channels = [2, 8, 16]
    batch, spatial = 2, 16

    key = jax.random.PRNGKey(0)
    key, kx = jax.random.split(key)
    x = jax.random.normal(kx, (batch, channels[0], spatial, spatial), jnp.float32)
    params = init_params(key, channels)
    packed = prepare_params(params)          # once, outside the forward path

    out = jax.block_until_ready(encoder_forward(x, packed))
    expected_shape = (batch, channels[-1], spatial // 4, spatial // 4)
    assert out.shape == expected_shape, (out.shape, expected_shape)

    ref = jax.block_until_ready(encoder_reference(x, params))
    # bf16 MXU operands (f32 accumulate) agree with the f32 reference to ~1e-2;
    # with MXU_DTYPE = float32 the kernel matches to 1e-3.
    tol = 4e-2 if MXU_DTYPE == jnp.bfloat16 else 1e-3
    err = float(jnp.max(jnp.abs(out - ref)))
    assert jnp.allclose(out, ref, atol=tol, rtol=tol), f"max abs err {err}"

    print("KERNEL_OK")
</pallas_src>

<mosaic_0001>
module attributes {stable_mosaic.version = 11 : i64} {
  func.func @_fused_encoder_kernel(%arg0: memref<256x32xbf16, #tpu.memory_space<vmem>>, %arg1: memref<32x8xbf16, #tpu.memory_space<vmem>>, %arg2: memref<1x8xf32, #tpu.memory_space<vmem>>, %arg3: memref<1x8xf32, #tpu.memory_space<vmem>>, %arg4: memref<256x1xf32, #tpu.memory_space<vmem>>, %arg5: memref<128x16xbf16, #tpu.memory_space<vmem>>, %arg6: memref<1x16xf32, #tpu.memory_space<vmem>>, %arg7: memref<1x16xf32, #tpu.memory_space<vmem>>, %arg8: memref<56x1xf32, #tpu.memory_space<vmem>>, %arg9: memref<56x16xf32, #tpu.memory_space<vmem>>, %arg10: memref<64x32xf32, #tpu.memory_space<vmem>>, %arg11: memref<56x128xbf16, #tpu.memory_space<vmem>>) attributes {dimension_semantics = [], scalar_prefetch = 0 : i64, scratch_operands = 2 : i64, tpu.core_type = #tpu.core_type<tc>} {
    %c0 = arith.constant 0 : index
    %c0_0 = arith.constant 0 : index
    %0 = vector.load %arg0[%c0, %c0_0] : memref<256x32xbf16, #tpu.memory_space<vmem>>, vector<256x32xbf16>
    %c0_1 = arith.constant 0 : index
    %c0_2 = arith.constant 0 : index
    %1 = vector.load %arg1[%c0_1, %c0_2] : memref<32x8xbf16, #tpu.memory_space<vmem>>, vector<32x8xbf16>
    %cst = arith.constant dense<0.000000e+00> : vector<256x8xf32>
    %2 = tpu.matmul %0, %1, %cst {dimension_numbers = #tpu.dot_dimension_numbers<[1], [0], [0], [1], [0, 0, 1, 1], [], []>} : vector<256x32xbf16>, vector<32x8xbf16>, vector<256x8xf32> -> vector<256x8xf32>
    %c0_3 = arith.constant 0 : index
    %c0_4 = arith.constant 0 : index
    %3 = vector.load %arg4[%c0_3, %c0_4] : memref<256x1xf32, #tpu.memory_space<vmem>>, vector<256x1xf32>
    %4 = vector.broadcast %3 : vector<256x1xf32> to vector<256x8xf32>
    %5 = arith.mulf %2, %4 : vector<256x8xf32>
    %cst_5 = arith.constant dense<0.000000e+00> : vector<8xf32>
    %6 = vector.multi_reduction <add>, %5, %cst_5 [0] : vector<256x8xf32> to vector<8xf32>
    %7 = vector.shape_cast %6 : vector<8xf32> to vector<1x8xf32>
    %cst_6 = arith.constant 7.812500e-03 : f32
    %8 = vector.broadcast %cst_6 : f32 to vector<1x8xf32>
    %9 = arith.mulf %7, %8 : vector<1x8xf32>
    %10 = vector.broadcast %9 : vector<1x8xf32> to vector<256x8xf32>
    %11 = arith.subf %2, %10 : vector<256x8xf32>
    %12 = vector.broadcast %3 : vector<256x1xf32> to vector<256x8xf32>
    %13 = arith.mulf %11, %12 : vector<256x8xf32>
    %14 = arith.mulf %13, %13 : vector<256x8xf32>
    %cst_7 = arith.constant dense<0.000000e+00> : vector<8xf32>
    %15 = vector.multi_reduction <add>, %14, %cst_7 [0] : vector<256x8xf32> to vector<8xf32>
    %16 = vector.shape_cast %15 : vector<8xf32> to vector<1x8xf32>
    %cst_8 = arith.constant 7.812500e-03 : f32
    %17 = vector.broadcast %cst_8 : f32 to vector<1x8xf32>
    %18 = arith.mulf %16, %17 : vector<1x8xf32>
    %c0_9 = arith.constant 0 : index
    %c0_10 = arith.constant 0 : index
    %19 = vector.load %arg2[%c0_9, %c0_10] : memref<1x8xf32, #tpu.memory_space<vmem>>, vector<1x8xf32>
    %cst_11 = arith.constant 9.99999974E-6 : f32
    %20 = vector.broadcast %cst_11 : f32 to vector<1x8xf32>
    %21 = arith.addf %18, %20 : vector<1x8xf32>
    %22 = math.rsqrt %21 : vector<1x8xf32>
    %23 = arith.mulf %19, %22 : vector<1x8xf32>
    %24 = vector.broadcast %23 : vector<1x8xf32> to vector<256x8xf32>
    %25 = arith.mulf %11, %24 : vector<256x8xf32>
    %c0_12 = arith.constant 0 : index
    %c0_13 = arith.constant 0 : index
    %26 = vector.load %arg3[%c0_12, %c0_13] : memref<1x8xf32, #tpu.memory_space<vmem>>, vector<1x8xf32>
    %27 = vector.broadcast %26 : vector<1x8xf32> to vector<256x8xf32>
    %28 = arith.addf %25, %27 : vector<256x8xf32>
    %cst_14 = arith.constant 0.000000e+00 : f32
    %29 = vector.broadcast %cst_14 : f32 to vector<256x8xf32>
    %30 = arith.cmpf ogt, %28, %29 : vector<256x8xf32>
    %cst_15 = arith.constant 2.000000e-01 : f32
    %31 = vector.broadcast %cst_15 : f32 to vector<256x8xf32>
    %32 = arith.mulf %31, %28 : vector<256x8xf32>
    %33 = arith.select %30, %28, %32 : vector<256x8xi1>, vector<256x8xf32>
    %34 = vector.broadcast %3 : vector<256x1xf32> to vector<256x8xf32>
    %35 = arith.mulf %33, %34 : vector<256x8xf32>
    %36 = vector.extract_strided_slice %35 {offsets = [0, 0], sizes = [64, 8], strides = [1, 1]} : vector<256x8xf32> to vector<64x8xf32>
    %c0_16 = arith.constant 0 : index
    %c0_17 = arith.constant 0 : index
    %37 = vector.load %arg10[%c0_16, %c0_17] : memref<64x32xf32, #tpu.memory_space<vmem>>, vector<64x8xf32>
    tpu.vector_store %arg10[%c0_16, %c0_17], %36 {strides = array<i32>} : memref<64x32xf32, #tpu.memory_space<vmem>>, vector<64x8xf32>,
    %38 = vector.extract_strided_slice %35 {offsets = [64, 0], sizes = [64, 8], strides = [1, 1]} : vector<256x8xf32> to vector<64x8xf32>
    %c0_18 = arith.constant 0 : index
    %c8 = arith.constant 8 : index
    %39 = vector.load %arg10[%c0_18, %c8] : memref<64x32xf32, #tpu.memory_space<vmem>>, vector<64x8xf32>
    tpu.vector_store %arg10[%c0_18, %c8], %38 {strides = array<i32>} : memref<64x32xf32, #tpu.memory_space<vmem>>, vector<64x8xf32>,
    %40 = vector.extract_strided_slice %35 {offsets = [128, 0], sizes = [64, 8], strides = [1, 1]} : vector<256x8xf32> to vector<64x8xf32>
    %c0_19 = arith.constant 0 : index
    %c16 = arith.constant 16 : index
    %41 = vector.load %arg10[%c0_19, %c16] : memref<64x32xf32, #tpu.memory_space<vmem>>, vector<64x8xf32>
    tpu.vector_store %arg10[%c0_19, %c16], %40 {strides = array<i32>} : memref<64x32xf32, #tpu.memory_space<vmem>>, vector<64x8xf32>,
    %42 = vector.extract_strided_slice %35 {offsets = [192, 0], sizes = [64, 8], strides = [1, 1]} : vector<256x8xf32> to vector<64x8xf32>
    %c0_20 = arith.constant 0 : index
    %c24 = arith.constant 24 : index
    %43 = vector.load %arg10[%c0_20, %c24] : memref<64x32xf32, #tpu.memory_space<vmem>>, vector<64x8xf32>
    tpu.vector_store %arg10[%c0_20, %c24], %42 {strides = array<i32>} : memref<64x32xf32, #tpu.memory_space<vmem>>, vector<64x8xf32>,
    %c0_21 = arith.constant 0 : index
    %c0_22 = arith.constant 0 : index
    %44 = vector.load %arg10[%c0_21, %c0_22] : memref<64x32xf32, #tpu.memory_space<vmem>>, vector<56x32xf32>
    %45 = arith.truncf %44 : vector<56x32xf32> to vector<56x32xbf16>
    %c0_23 = arith.constant 0 : index
    %c0_24 = arith.constant 0 : index
    %46 = vector.load %arg11[%c0_23, %c0_24] : memref<56x128xbf16, #tpu.memory_space<vmem>>, vector<56x32xbf16>
    tpu.vector_store %arg11[%c0_23, %c0_24], %45 {strides = array<i32>} : memref<56x128xbf16, #tpu.memory_space<vmem>>, vector<56x32xbf16>,
    %c1 = arith.constant 1 : index
    %c0_25 = arith.constant 0 : index
    %47 = vector.load %arg10[%c1, %c0_25] : memref<64x32xf32, #tpu.memory_space<vmem>>, vector<56x32xf32>
    %48 = arith.truncf %47 : vector<56x32xf32> to vector<56x32xbf16>
    %c0_26 = arith.constant 0 : index
    %c32 = arith.constant 32 : index
    %49 = vector.load %arg11[%c0_26, %c32] : memref<56x128xbf16, #tpu.memory_space<vmem>>, vector<56x32xbf16>
    tpu.vector_store %arg11[%c0_26, %c32], %48 {strides = array<i32>} : memref<56x128xbf16, #tpu.memory_space<vmem>>, vector<56x32xbf16>,
    %c5 = arith.constant 5 : index
    %c0_27 = arith.constant 0 : index
    %50 = vector.load %arg10[%c5, %c0_27] : memref<64x32xf32, #tpu.memory_space<vmem>>, vector<56x32xf32>
    %51 = arith.truncf %50 : vector<56x32xf32> to vector<56x32xbf16>
    %c0_28 = arith.constant 0 : index
    %c64 = arith.constant 64 : index
    %52 = vector.load %arg11[%c0_28, %c64] : memref<56x128xbf16, #tpu.memory_space<vmem>>, vector<56x32xbf16>
    tpu.vector_store %arg11[%c0_28, %c64], %51 {strides = array<i32>} : memref<56x128xbf16, #tpu.memory_space<vmem>>, vector<56x32xbf16>,
    %c6 = arith.constant 6 : index
    %c0_29 = arith.constant 0 : index
    %53 = vector.load %arg10[%c6, %c0_29] : memref<64x32xf32, #tpu.memory_space<vmem>>, vector<56x32xf32>
    %54 = arith.truncf %53 : vector<56x32xf32> to vector<56x32xbf16>
    %c0_30 = arith.constant 0 : index
    %c96 = arith.constant 96 : index
    %55 = vector.load %arg11[%c0_30, %c96] : memref<56x128xbf16, #tpu.memory_space<vmem>>, vector<56x32xbf16>
    tpu.vector_store %arg11[%c0_30, %c96], %54 {strides = array<i32>} : memref<56x128xbf16, #tpu.memory_space<vmem>>, vector<56x32xbf16>,
    %c0_31 = arith.constant 0 : index
    %c0_32 = arith.constant 0 : index
    %56 = vector.load %arg11[%c0_31, %c0_32] : memref<56x128xbf16, #tpu.memory_space<vmem>>, vector<56x128xbf16>
    %c0_33 = arith.constant 0 : index
    %c0_34 = arith.constant 0 : index
    %57 = vector.load %arg5[%c0_33, %c0_34] : memref<128x16xbf16, #tpu.memory_space<vmem>>, vector<128x16xbf16>
    %cst_35 = arith.constant dense<0.000000e+00> : vector<56x16xf32>
    %58 = tpu.matmul %56, %57, %cst_35 {dimension_numbers = #tpu.dot_dimension_numbers<[1], [0], [0], [1], [0, 0, 1, 1], [], []>} : vector<56x128xbf16>, vector<128x16xbf16>, vector<56x16xf32> -> vector<56x16xf32>
    %c0_36 = arith.constant 0 : index
    %c0_37 = arith.constant 0 : index
    %59 = vector.load %arg8[%c0_36, %c0_37] : memref<56x1xf32, #tpu.memory_space<vmem>>, vector<56x1xf32>
    %60 = vector.broadcast %59 : vector<56x1xf32> to vector<56x16xf32>
    %61 = arith.mulf %58, %60 : vector<56x16xf32>
    %cst_38 = arith.constant dense<0.000000e+00> : vector<16xf32>
    %62 = vector.multi_reduction <add>, %61, %cst_38 [0] : vector<56x16xf32> to vector<16xf32>
    %63 = vector.shape_cast %62 : vector<16xf32> to vector<1x16xf32>
    %cst_39 = arith.constant 3.125000e-02 : f32
    %64 = vector.broadcast %cst_39 : f32 to vector<1x16xf32>
    %65 = arith.mulf %63, %64 : vector<1x16xf32>
    %66 = vector.broadcast %65 : vector<1x16xf32> to vector<56x16xf32>
    %67 = arith.subf %58, %66 : vector<56x16xf32>
    %68 = vector.broadcast %59 : vector<56x1xf32> to vector<56x16xf32>
    %69 = arith.mulf %67, %68 : vector<56x16xf32>
    %70 = arith.mulf %69, %69 : vector<56x16xf32>
    %cst_40 = arith.constant dense<0.000000e+00> : vector<16xf32>
    %71 = vector.multi_reduction <add>, %70, %cst_40 [0] : vector<56x16xf32> to vector<16xf32>
    %72 = vector.shape_cast %71 : vector<16xf32> to vector<1x16xf32>
    %cst_41 = arith.constant 3.125000e-02 : f32
    %73 = vector.broadcast %cst_41 : f32 to vector<1x16xf32>
    %74 = arith.mulf %72, %73 : vector<1x16xf32>
    %c0_42 = arith.constant 0 : index
    %c0_43 = arith.constant 0 : index
    %75 = vector.load %arg6[%c0_42, %c0_43] : memref<1x16xf32, #tpu.memory_space<vmem>>, vector<1x16xf32>
    %cst_44 = arith.constant 9.99999974E-6 : f32
    %76 = vector.broadcast %cst_44 : f32 to vector<1x16xf32>
    %77 = arith.addf %74, %76 : vector<1x16xf32>
    %78 = math.rsqrt %77 : vector<1x16xf32>
    %79 = arith.mulf %75, %78 : vector<1x16xf32>
    %80 = vector.broadcast %79 : vector<1x16xf32> to vector<56x16xf32>
    %81 = arith.mulf %67, %80 : vector<56x16xf32>
    %c0_45 = arith.constant 0 : index
    %c0_46 = arith.constant 0 : index
    %82 = vector.load %arg7[%c0_45, %c0_46] : memref<1x16xf32, #tpu.memory_space<vmem>>, vector<1x16xf32>
    %83 = vector.broadcast %82 : vector<1x16xf32> to vector<56x16xf32>
    %84 = arith.addf %81, %83 : vector<56x16xf32>
    %cst_47 = arith.constant 0.000000e+00 : f32
    %85 = vector.broadcast %cst_47 : f32 to vector<56x16xf32>
    %86 = arith.cmpf ogt, %84, %85 : vector<56x16xf32>
    %cst_48 = arith.constant 2.000000e-01 : f32
    %87 = vector.broadcast %cst_48 : f32 to vector<56x16xf32>
    %88 = arith.mulf %87, %84 : vector<56x16xf32>
    %89 = arith.select %86, %84, %88 : vector<56x16xi1>, vector<56x16xf32>
    %c0_49 = arith.constant 0 : index
    %c0_50 = arith.constant 0 : index
    %90 = vector.load %arg9[%c0_49, %c0_50] : memref<56x16xf32, #tpu.memory_space<vmem>>, vector<56x16xf32>
    tpu.vector_store %arg9[%c0_49, %c0_50], %89 {strides = array<i32>} : memref<56x16xf32, #tpu.memory_space<vmem>>, vector<56x16xf32>,
    return
  }
}

</mosaic_0001>

<llo_original>
// kernel: encoder_forward.1
$region0: #{encoder_forward.1}
  #allocation0 [shape = 'u32[]', space=smem, size = 0x4, offset = 0x4, fixed_abs, tag = 'smem constant byte address 0x4 - core index']
  #allocation1 [shape = 'u32[144,128]{1,0:T(1,128)}', space=vmem, size = 0x12000, scoped, tag = 'internal scratch']
  #allocation2 [shape = 'f32[64,32]{1,0:T(8,128)}', space=vmem, size = 0x8000, scoped, tag = 'scratch operand']
  #allocation3 [shape = 'bf16[56,128]{1,0:T(8,128)(2,1)}', space=vmem, size = 0x3800, scoped, tag = 'scratch operand']
  %s0 = inlined_call_operand.vmem [shape: bf16[256,32], index: 0, kind: input, shape index: {}]
  %s1 = inlined_call_operand.vmem [shape: bf16[32,8], index: 1, kind: input, shape index: {}]
  %s2 = inlined_call_operand.vmem [shape: f32[1,8], index: 2, kind: input, shape index: {}]
  %s3 = inlined_call_operand.vmem [shape: f32[1,8], index: 3, kind: input, shape index: {}]
  %s4 = inlined_call_operand.vmem [shape: f32[256,1], index: 4, kind: input, shape index: {}]
  %s5 = inlined_call_operand.vmem [shape: bf16[128,16], index: 5, kind: input, shape index: {}]
  %s6 = inlined_call_operand.vmem [shape: f32[1,16], index: 6, kind: input, shape index: {}]
  %s7 = inlined_call_operand.vmem [shape: f32[1,16], index: 7, kind: input, shape index: {}]
  %s8 = inlined_call_operand.vmem [shape: f32[56,1], index: 8, kind: input, shape index: {}]
  %s9 = inlined_call_operand.vmem [shape: f32[56,16], index: 9, kind: output, shape index: {}]
  %s10 = sld [smem:[#allocation0]]
  $region46: #{encoder_forward.1} parent=0
    _
  %s12 = ssub.s32 1, %s10
  %s13 = scalar_select 0, %s12, %s10
  // Predicated region
  $region2: #{encoder_forward.1} parent=0 // pred_check
    _
  $region3: #{encoder_forward.1} parent=0 // pred_check_branch
    %15 = sbr.rel (0) target = $region5
  $region4: #{encoder_forward.1} parent=0 // pred_region
    _
  $region5: #{encoder_forward.1} parent=0 // pred_fallthru
    _
  // Predicated region
  $region6: #{encoder_forward.1} parent=0 // pred_check
    _
  $region7: #{encoder_forward.1} parent=0 // pred_check_branch
    %17 = sbr.rel (0) target = $region9
  $region8: #{encoder_forward.1} parent=0 // pred_region
    _
  $region9: #{encoder_forward.1} parent=0 // pred_fallthru
    _
  // Predicated region
  $region10: #{encoder_forward.1} parent=0 // pred_check
    _
  $region11: #{encoder_forward.1} parent=0 // pred_check_branch
    %19 = sbr.rel (0) target = $region13
  $region12: #{encoder_forward.1} parent=0 // pred_region
    _
  $region13: #{encoder_forward.1} parent=0 // pred_fallthru
    _
  // Predicated region
  $region14: #{encoder_forward.1} parent=0 // pred_check
    _
  $region15: #{encoder_forward.1} parent=0 // pred_check_branch
    %21 = sbr.rel (0) target = $region17
  $region16: #{encoder_forward.1} parent=0 // pred_region
    _
  $region17: #{encoder_forward.1} parent=0 // pred_fallthru
    _
  // Predicated region
  $region18: #{encoder_forward.1} parent=0 // pred_check
    _
  $region19: #{encoder_forward.1} parent=0 // pred_check_branch
    %23 = sbr.rel (0) target = $region21
  $region20: #{encoder_forward.1} parent=0 // pred_region
    _
  $region21: #{encoder_forward.1} parent=0 // pred_fallthru
    _
  // Predicated region
  $region22: #{encoder_forward.1} parent=0 // pred_check
    _
  $region23: #{encoder_forward.1} parent=0 // pred_check_branch
    %25 = sbr.rel (0) target = $region25
  $region24: #{encoder_forward.1} parent=0 // pred_region
    _
  $region25: #{encoder_forward.1} parent=0 // pred_fallthru
    _
  // Predicated region
  $region26: #{encoder_forward.1} parent=0 // pred_check
    _
  $region27: #{encoder_forward.1} parent=0 // pred_check_branch
    %27 = sbr.rel (0) target = $region29
  $region28: #{encoder_forward.1} parent=0 // pred_region
    _
  $region29: #{encoder_forward.1} parent=0 // pred_fallthru
    _
  // Predicated region
  $region30: #{encoder_forward.1} parent=0 // pred_check
    _
  $region31: #{encoder_forward.1} parent=0 // pred_check_branch
    %29 = sbr.rel (0) target = $region33
  $region32: #{encoder_forward.1} parent=0 // pred_region
    _
  $region33: #{encoder_forward.1} parent=0 // pred_fallthru
    _
  // Predicated region
  $region34: #{encoder_forward.1} parent=0 // pred_check
    _
  $region35: #{encoder_forward.1} parent=0 // pred_check_branch
    %31 = sbr.rel (0) target = $region37
  $region36: #{encoder_forward.1} parent=0 // pred_region
    _
  $region37: #{encoder_forward.1} parent=0 // pred_fallthru
    _
  %v33 = vld [vmem:[%s0] sm:$0xf]
  %v34 = vld [vmem:[%s0 + $0x4] sm:$0xf]
  %v35 = vld [vmem:[%s0 + $0x8] sm:$0xf]
  %v36 = vld [vmem:[%s0 + $0xc] sm:$0xf]
  %v37 = vld [vmem:[%s0 + $0x10] sm:$0xf]
  %v38 = vld [vmem:[%s0 + $0x14] sm:$0xf]
  %v39 = vld [vmem:[%s0 + $0x18] sm:$0xf]
  %v40 = vld [vmem:[%s0 + $0x1c] sm:$0xf]
  %v41 = vld [vmem:[%s0 + $0x20] sm:$0xf]
  %v42 = vld [vmem:[%s0 + $0x24] sm:$0xf]
  %v43 = vld [vmem:[%s0 + $0x28] sm:$0xf]
  %v44 = vld [vmem:[%s0 + $0x2c] sm:$0xf]
  %v45 = vld [vmem:[%s0 + $0x30] sm:$0xf]
  %v46 = vld [vmem:[%s0 + $0x34] sm:$0xf]
  %v47 = vld [vmem:[%s0 + $0x38] sm:$0xf]
  %v48 = vld [vmem:[%s0 + $0x3c] sm:$0xf]
  %v49 = vld [vmem:[%s0 + $0x40] sm:$0xf]
  %v50 = vld [vmem:[%s0 + $0x44] sm:$0xf]
  %v51 = vld [vmem:[%s0 + $0x48] sm:$0xf]
  %v52 = vld [vmem:[%s0 + $0x4c] sm:$0xf]
  %v53 = vld [vmem:[%s0 + $0x50] sm:$0xf]
  %v54 = vld [vmem:[%s0 + $0x54] sm:$0xf]
  %v55 = vld [vmem:[%s0 + $0x58] sm:$0xf]
  %v56 = vld [vmem:[%s0 + $0x5c] sm:$0xf]
  %v57 = vld [vmem:[%s0 + $0x60] sm:$0xf]
  %v58 = vld [vmem:[%s0 + $0x64] sm:$0xf]
  %v59 = vld [vmem:[%s0 + $0x68] sm:$0xf]
  %v60 = vld [vmem:[%s0 + $0x6c] sm:$0xf]
  %v61 = vld [vmem:[%s0 + $0x70] sm:$0xf]
  %v62 = vld [vmem:[%s0 + $0x74] sm:$0xf]
  %v63 = vld [vmem:[%s0 + $0x78] sm:$0xf]
  %v64 = vld [vmem:[%s0 + $0x7c] sm:$0xf]
  %v65 = vld [vmem:[%s1] sm:$0xf]
  %v66 = vld [vmem:[%s1 + $0x4] sm:$0xf]
  %v67 = vld [vmem:[%s1 + $0x8] sm:$0xf]
  %v68 = vld [vmem:[%s1 + $0xc] sm:$0xf]
  %v101 = vunpack.c.l.b16 %v33
  %v102 = vunpack.c.l.b16 %v34
  %v103 = vunpack.c.l.b16 %v35
  %v104 = vunpack.c.l.b16 %v36
  %v105 = vunpack.c.l.b16 %v37
  %v106 = vunpack.c.l.b16 %v38
  %v107 = vunpack.c.l.b16 %v39
  %v108 = vunpack.c.l.b16 %v40
  %v109 = vunpack.c.l.b16 %v41
  %v110 = vunpack.c.l.b16 %v42
  %v111 = vunpack.c.l.b16 %v43
  %v112 = vunpack.c.l.b16 %v44
  %v113 = vunpack.c.l.b16 %v45
  %v114 = vunpack.c.l.b16 %v46
  %v115 = vunpack.c.l.b16 %v47
  %v116 = vunpack.c.l.b16 %v48
  %v117 = vunpack.c.l.b16 %v49
  %v118 = vunpack.c.l.b16 %v50
  %v119 = vunpack.c.l.b16 %v51
  %v120 = vunpack.c.l.b16 %v52
  %v121 = vunpack.c.l.b16 %v53
  %v122 = vunpack.c.l.b16 %v54
  %v123 = vunpack.c.l.b16 %v55
  %v124 = vunpack.c.l.b16 %v56
  %v125 = vunpack.c.l.b16 %v57
  %v126 = vunpack.c.l.b16 %v58
  %v127 = vunpack.c.l.b16 %v59
  %v128 = vunpack.c.l.b16 %v60
  %v129 = vunpack.c.l.b16 %v61
  %v130 = vunpack.c.l.b16 %v62
  %v131 = vunpack.c.l.b16 %v63
  %v132 = vunpack.c.l.b16 %v64
  %v133 = vpack.c.b16 %v102, %v101
  %v134 = vpack.c.b16 %v104, %v103
  %v135 = vpack.c.b16 %v106, %v105
  %v136 = vpack.c.b16 %v108, %v107
  %v137 = vpack.c.b16 %v110, %v109
  %v138 = vpack.c.b16 %v112, %v111
  %v139 = vpack.c.b16 %v114, %v113
  %v140 = vpack.c.b16 %v116, %v115
  %v141 = vpack.c.b16 %v118, %v117
  %v142 = vpack.c.b16 %v120, %v119
  %v143 = vpack.c.b16 %v122, %v121
  %v144 = vpack.c.b16 %v124, %v123
  %v145 = vpack.c.b16 %v126, %v125
  %v146 = vpack.c.b16 %v128, %v127
  %v147 = vpack.c.b16 %v130, %v129
  %v148 = vpack.c.b16 %v132, %v131
  %v153 = vunpack.c.l.b16 %v65
  %v154 = vunpack.c.l.b16 %v66
  %v155 = vunpack.c.l.b16 %v67
  %v156 = vunpack.c.l.b16 %v68
  %v157 = vpack.c.b16 %v154, %v153
  %v158 = vpack.c.b16 %v156, %v155
  %vm161 = vcmask 261120
  %v163 = vsel %vm161, %v133, 0
  %v166 = vsel %vm161, %v134, 0
  %v169 = vsel %vm161, %v135, 0
  %v172 = vsel %vm161, %v136, 0
  %v175 = vsel %vm161, %v137, 0
  %v178 = vsel %vm161, %v138, 0
  %v181 = vsel %vm161, %v139, 0
  %v184 = vsel %vm161, %v140, 0
  %v187 = vsel %vm161, %v141, 0
  %v190 = vsel %vm161, %v142, 0
  %v193 = vsel %vm161, %v143, 0
  %v196 = vsel %vm161, %v144, 0
  %v199 = vsel %vm161, %v145, 0
  %v202 = vsel %vm161, %v146, 0
  %v205 = vsel %vm161, %v147, 0
  %v208 = vsel %vm161, %v148, 0
  %210 = vmatprep.subr.bf16.mxu0 0
  %211 = vmatpush1.bf16.msra.mxu0 %v157
  %212 = vmatprep.subr.bf16.mxu0 0
  %213 = vmatpush1.bf16.msra.mxu0 %v158
  %214 = vmatprep.subr.bf16.mxu0 0
  %215 = vmatpush1.bf16.msra.mxu0 0
  %216 = vmatprep.subr.bf16.mxu0 0
  %217 = vmatpush1.bf16.msra.mxu0 0
  %218 = vmatprep.subr.bf16.mxu0 0
  %219 = vmatpush1.bf16.msra.mxu0 0
  %220 = vmatprep.subr.bf16.mxu0 0
  %221 = vmatpush1.bf16.msra.mxu0 0
  %222 = vmatprep.subr.bf16.mxu0 0
  %223 = vmatpush1.bf16.msra.mxu0 0
  %224 = vmatprep.subr.bf16.mxu0 0
  %225 = vmatpush1.bf16.msra.mxu0 0
  %226 = vmatprep.subr.bf16.mxu0 0
  %227 = vmatpush1.bf16.msra.mxu0 0
  %228 = vmatprep.subr.bf16.mxu0 0
  %229 = vmatpush1.bf16.msra.mxu0 0
  %230 = vmatprep.subr.bf16.mxu0 0
  %231 = vmatpush1.bf16.msra.mxu0 0
  %232 = vmatprep.subr.bf16.mxu0 0
  %233 = vmatpush1.bf16.msra.mxu0 0
  %234 = vmatprep.subr.bf16.mxu0 0
  %235 = vmatpush1.bf16.msra.mxu0 0
  %236 = vmatprep.subr.bf16.mxu0 0
  %237 = vmatpush1.bf16.msra.mxu0 0
  %238 = vmatprep.subr.bf16.mxu0 0
  %239 = vmatpush1.bf16.msra.mxu0 0
  %240 = vmatprep.subr.bf16.mxu0 0
  %241 = vmatpush1.bf16.msra.mxu0 0
  %242 = vmatprep.mubr.bf16.mxu0 0
  %243 = vmatmul.mubr.bf16.gmra.mrb[0].mxu0 %v163
  %v244 = vpop.f32.mrb[0].mxu0
  %v245 = vadd.f32 0.0, %v244
  %v246 = vpop.f32.mrb[0].mxu0
  %v247 = vpop.f32.mrb[0].mxu0
  %v248 = vadd.f32 0.0, %v247
  %v249 = vpop.f32.mrb[0].mxu0
  %250 = vmatprep.mubr.bf16.mxu0 0
  %251 = vmatmul.mubr.bf16.gmra.mrb[0].mxu0 %v166
  %v252 = vpop.f32.mrb[0].mxu0
  %v253 = vadd.f32 0.0, %v252
  %v254 = vpop.f32.mrb[0].mxu0
  %v255 = vpop.f32.mrb[0].mxu0
  %v256 = vadd.f32 0.0, %v255
  %v257 = vpop.f32.mrb[0].mxu0
  %258 = vmatprep.mubr.bf16.mxu0 0
  %259 = vmatmul.mubr.bf16.gmra.mrb[0].mxu0 %v169
  %v260 = vpop.f32.mrb[0].mxu0
  %v261 = vadd.f32 0.0, %v260
  %v262 = vpop.f32.mrb[0].mxu0
  %v263 = vpop.f32.mrb[0].mxu0
  %v264 = vadd.f32 0.0, %v263
  %v265 = vpop.f32.mrb[0].mxu0
  %266 = vmatprep.mubr.bf16.mxu0 0
  %267 = vmatmul.mubr.bf16.gmra.mrb[0].mxu0 %v172
  %v268 = vpop.f32.mrb[0].mxu0
  %v269 = vadd.f32 0.0, %v268
  %v270 = vpop.f32.mrb[0].mxu0
  %v271 = vpop.f32.mrb[0].mxu0
  %v272 = vadd.f32 0.0, %v271
  %v273 = vpop.f32.mrb[0].mxu0
  %274 = vmatprep.mubr.bf16.mxu0 0
  %275 = vmatmul.mubr.bf16.gmra.mrb[0].mxu0 %v175
  %v276 = vpop.f32.mrb[0].mxu0
  %v277 = vadd.f32 0.0, %v276
  %v278 = vpop.f32.mrb[0].mxu0
  %v279 = vpop.f32.mrb[0].mxu0
  %v280 = vadd.f32 0.0, %v279
  %v281 = vpop.f32.mrb[0].mxu0
  %282 = vmatprep.mubr.bf16.mxu0 0
  %283 = vmatmul.mubr.bf16.gmra.mrb[0].mxu0 %v178
  %v284 = vpop.f32.mrb[0].mxu0
  %v285 = vadd.f32 0.0, %v284
  %v286 = vpop.f32.mrb[0].mxu0
  %v287 = vpop.f32.mrb[0].mxu0
  %v288 = vadd.f32 0.0, %v287
  %v289 = vpop.f32.mrb[0].mxu0
  %290 = vmatprep.mubr.bf16.mxu0 0
  %291 = vmatmul.mubr.bf16.gmra.mrb[0].mxu0 %v181
  %v292 = vpop.f32.mrb[0].mxu0
  %v293 = vadd.f32 0.0, %v292
  %v294 = vpop.f32.mrb[0].mxu0
  %v295 = vpop.f32.mrb[0].mxu0
  %v296 = vadd.f32 0.0, %v295
  %v297 = vpop.f32.mrb[0].mxu0
  %298 = vmatprep.mubr.bf16.mxu0 0
  %299 = vmatmul.mubr.bf16.gmra.mrb[0].mxu0 %v184
  %v300 = vpop.f32.mrb[0].mxu0
  %v301 = vadd.f32 0.0, %v300
  %v302 = vpop.f32.mrb[0].mxu0
  %v303 = vpop.f32.mrb[0].mxu0
  %v304 = vadd.f32 0.0, %v303
  %v305 = vpop.f32.mrb[0].mxu0
  %306 = vmatprep.mubr.bf16.mxu0 0
  %307 = vmatmul.mubr.bf16.gmra.mrb[0].mxu0 %v187
  %v308 = vpop.f32.mrb[0].mxu0
  %v309 = vadd.f32 0.0, %v308
  %v310 = vpop.f32.mrb[0].mxu0
  %v311 = vpop.f32.mrb[0].mxu0
  %v312 = vadd.f32 0.0, %v311
  %v313 = vpop.f32.mrb[0].mxu0
  %314 = vmatprep.mubr.bf16.mxu0 0
  %315 = vmatmul.mubr.bf16.gmra.mrb[0].mxu0 %v190
  %v316 = vpop.f32.mrb[0].mxu0
  %v317 = vadd.f32 0.0, %v316
  %v318 = vpop.f32.mrb[0].mxu0
  %v319 = vpop.f32.mrb[0].mxu0
  %v320 = vadd.f32 0.0, %v319
  %v321 = vpop.f32.mrb[0].mxu0
  %322 = vmatprep.mubr.bf16.mxu0 0
  %323 = vmatmul.mubr.bf16.gmra.mrb[0].mxu0 %v193
  %v324 = vpop.f32.mrb[0].mxu0
  %v325 = vadd.f32 0.0, %v324
  %v326 = vpop.f32.mrb[0].mxu0
  %v327 = vpop.f32.mrb[0].mxu0
  %v328 = vadd.f32 0.0, %v327
  %v329 = vpop.f32.mrb[0].mxu0
  %330 = vmatprep.mubr.bf16.mxu0 0
  %331 = vmatmul.mubr.bf16.gmra.mrb[0].mxu0 %v196
  %v332 = vpop.f32.mrb[0].mxu0
  %v333 = vadd.f32 0.0, %v332
  %v334 = vpop.f32.mrb[0].mxu0
  %v335 = vpop.f32.mrb[0].mxu0
  %v336 = vadd.f32 0.0, %v335
  %v337 = vpop.f32.mrb[0].mxu0
  %338 = vmatprep.mubr.bf16.mxu0 0
  %339 = vmatmul.mubr.bf16.gmra.mrb[0].mxu0 %v199
  %v340 = vpop.f32.mrb[0].mxu0
  %v341 = vadd.f32 0.0, %v340
  %v342 = vpop.f32.mrb[0].mxu0
  %v343 = vpop.f32.mrb[0].mxu0
  %v344 = vadd.f32 0.0, %v343
  %v345 = vpop.f32.mrb[0].mxu0
  %346 = vmatprep.mubr.bf16.mxu0 0
  %347 = vmatmul.mubr.bf16.gmra.mrb[0].mxu0 %v202
  %v348 = vpop.f32.mrb[0].mxu0
  %v349 = vadd.f32 0.0, %v348
  %v350 = vpop.f32.mrb[0].mxu0
  %v351 = vpop.f32.mrb[0].mxu0
  %v352 = vadd.f32 0.0, %v351
  %v353 = vpop.f32.mrb[0].mxu0
  %354 = vmatprep.mubr.bf16.mxu0 0
  %355 = vmatmul.mubr.bf16.gmra.mrb[0].mxu0 %v205
  %v356 = vpop.f32.mrb[0].mxu0
  %v357 = vadd.f32 0.0, %v356
  %v358 = vpop.f32.mrb[0].mxu0
  %v359 = vpop.f32.mrb[0].mxu0
  %v360 = vadd.f32 0.0, %v359
  %v361 = vpop.f32.mrb[0].mxu0
  %362 = vmatprep.mubr.bf16.mxu0 0
  %363 = vmatmul.mubr.bf16.gmra.mrb[0].mxu0 %v208
  %v364 = vpop.f32.mrb[0].mxu0
  %v365 = vadd.f32 0.0, %v364
  %v366 = vpop.f32.mrb[0].mxu0
  %v367 = vpop.f32.mrb[0].mxu0
  %v368 = vadd.f32 0.0, %v367
  %v369 = vpop.f32.mrb[0].mxu0
  %370 = vdwg.mxu0
  %v371 = vld [vmem:[%s4] sm:$0xff]
  %v372 = vld [vmem:[%s4 + $0x8] sm:$0xff]
  %v373 = vld [vmem:[%s4 + $0x10] sm:$0xff]
  %v374 = vld [vmem:[%s4 + $0x18] sm:$0xff]
  %v375 = vld [vmem:[%s4 + $0x20] sm:$0xff]
  %v376 = vld [vmem:[%s4 + $0x28] sm:$0xff]
  %v377 = vld [vmem:[%s4 + $0x30] sm:$0xff]
  %v378 = vld [vmem:[%s4 + $0x38] sm:$0xff]
  %v379 = vld [vmem:[%s4 + $0x40] sm:$0xff]
  %v380 = vld [vmem:[%s4 + $0x48] sm:$0xff]
  %v381 = vld [vmem:[%s4 + $0x50] sm:$0xff]
  %v382 = vld [vmem:[%s4 + $0x58] sm:$0xff]
  %v383 = vld [vmem:[%s4 + $0x60] sm:$0xff]
  %v384 = vld [vmem:[%s4 + $0x68] sm:$0xff]
  %v385 = vld [vmem:[%s4 + $0x70] sm:$0xff]
  %v386 = vld [vmem:[%s4 + $0x78] sm:$0xff]
  %v387 = vld [vmem:[%s4 + $0x80] sm:$0xff]
  %v388 = vld [vmem:[%s4 + $0x88] sm:$0xff]
  %v389 = vld [vmem:[%s4 + $0x90] sm:$0xff]
  %v390 = vld [vmem:[%s4 + $0x98] sm:$0xff]
  %v391 = vld [vmem:[%s4 + $0xa0] sm:$0xff]
  %v392 = vld [vmem:[%s4 + $0xa8] sm:$0xff]
  %v393 = vld [vmem:[%s4 + $0xb0] sm:$0xff]
  %v394 = vld [vmem:[%s4 + $0xb8] sm:$0xff]
  %v395 = vld [vmem:[%s4 + $0xc0] sm:$0xff]
  %v396 = vld [vmem:[%s4 + $0xc8] sm:$0xff]
  %v397 = vld [vmem:[%s4 + $0xd0] sm:$0xff]
  %v398 = vld [vmem:[%s4 + $0xd8] sm:$0xff]
  %v399 = vld [vmem:[%s4 + $0xe0] sm:$0xff]
  %v400 = vld [vmem:[%s4 + $0xe8] sm:$0xff]
  %v401 = vld [vmem:[%s4 + $0xf0] sm:$0xff]
  %v402 = vld [vmem:[%s4 + $0xf8] sm:$0xff]
  %404 = vset.pattern.permute.xlu0 0
  %405 = vperm.xlu0 %404, %v371
  %v406 = vpop.permute.xlu0 %405
  %409 = vset.pattern.permute.xlu0 0
  %410 = vperm.xlu0 %409, %v372
  %v411 = vpop.permute.xlu0 %410
  %414 = vset.pattern.permute.xlu0 0
  %415 = vperm.xlu0 %414, %v373
  %v416 = vpop.permute.xlu0 %415
  %419 = vset.pattern.permute.xlu0 0
  %420 = vperm.xlu0 %419, %v374
  %v421 = vpop.permute.xlu0 %420
  %424 = vset.pattern.permute.xlu0 0
  %425 = vperm.xlu0 %424, %v375
  %v426 = vpop.permute.xlu0 %425
  %429 = vset.pattern.permute.xlu0 0
  %430 = vperm.xlu0 %429, %v376
  %v431 = vpop.permute.xlu0 %430
  %434 = vset.pattern.permute.xlu0 0
  %435 = vperm.xlu0 %434, %v377
  %v436 = vpop.permute.xlu0 %435
  %439 = vset.pattern.permute.xlu0 0
  %440 = vperm.xlu0 %439, %v378
  %v441 = vpop.permute.xlu0 %440
  %444 = vset.pattern.permute.xlu0 0
  %445 = vperm.xlu0 %444, %v379
  %v446 = vpop.permute.xlu0 %445
  %449 = vset.pattern.permute.xlu0 0
  %450 = vperm.xlu0 %449, %v380
  %v451 = vpop.permute.xlu0 %450
  %454 = vset.pattern.permute.xlu0 0
  %455 = vperm.xlu0 %454, %v381
  %v456 = vpop.permute.xlu0 %455
  %459 = vset.pattern.permute.xlu0 0
  %460 = vperm.xlu0 %459, %v382
  %v461 = vpop.permute.xlu0 %460
  %464 = vset.pattern.permute.xlu0 0
  %465 = vperm.xlu0 %464, %v383
  %v466 = vpop.permute.xlu0 %465
  %469 = vset.pattern.permute.xlu0 0
  %470 = vperm.xlu0 %469, %v384
  %v471 = vpop.permute.xlu0 %470
  %474 = vset.pattern.permute.xlu0 0
  %475 = vperm.xlu0 %474, %v385
  %v476 = vpop.permute.xlu0 %475
  %479 = vset.pattern.permute.xlu0 0
  %480 = vperm.xlu0 %479, %v386
  %v481 = vpop.permute.xlu0 %480
  %484 = vset.pattern.permute.xlu0 0
  %485 = vperm.xlu0 %484, %v387
  %v486 = vpop.permute.xlu0 %485
  %489 = vset.pattern.permute.xlu0 0
  %490 = vperm.xlu0 %489, %v388
  %v491 = vpop.permute.xlu0 %490
  %494 = vset.pattern.permute.xlu0 0
  %495 = vperm.xlu0 %494, %v389
  %v496 = vpop.permute.xlu0 %495
  %499 = vset.pattern.permute.xlu0 0
  %500 = vperm.xlu0 %499, %v390
  %v501 = vpop.permute.xlu0 %500
  %504 = vset.pattern.permute.xlu0 0
  %505 = vperm.xlu0 %504, %v391
  %v506 = vpop.permute.xlu0 %505
  %509 = vset.pattern.permute.xlu0 0
  %510 = vperm.xlu0 %509, %v392
  %v511 = vpop.permute.xlu0 %510
  %514 = vset.pattern.permute.xlu0 0
  %515 = vperm.xlu0 %514, %v393
  %v516 = vpop.permute.xlu0 %515
  %519 = vset.pattern.permute.xlu0 0
  %520 = vperm.xlu0 %519, %v394
  %v521 = vpop.permute.xlu0 %520
  %524 = vset.pattern.permute.xlu0 0
  %525 = vperm.xlu0 %524, %v395
  %v526 = vpop.permute.xlu0 %525
  %529 = vset.pattern.permute.xlu0 0
  %530 = vperm.xlu0 %529, %v396
  %v531 = vpop.permute.xlu0 %530
  %534 = vset.pattern.permute.xlu0 0
  %535 = vperm.xlu0 %534, %v397
  %v536 = vpop.permute.xlu0 %535
  %539 = vset.pattern.permute.xlu0 0
  %540 = vperm.xlu0 %539, %v398
  %v541 = vpop.permute.xlu0 %540
  %544 = vset.pattern.permute.xlu0 0
  %545 = vperm.xlu0 %544, %v399
  %v546 = vpop.permute.xlu0 %545
  %549 = vset.pattern.permute.xlu0 0
  %550 = vperm.xlu0 %549, %v400
  %v551 = vpop.permute.xlu0 %550
  %554 = vset.pattern.permute.xlu0 0
  %555 = vperm.xlu0 %554, %v401
  %v556 = vpop.permute.xlu0 %555
  %559 = vset.pattern.permute.xlu0 0
  %560 = vperm.xlu0 %559, %v402
  %v561 = vpop.permute.xlu0 %560
  %v563 = vmul.f32 %v245, %v406
  %v564 = vmul.f32 %v248, %v411
  %v565 = vmul.f32 %v253, %v416
  %v566 = vmul.f32 %v256, %v421
  %v567 = vmul.f32 %v261, %v426
  %v568 = vmul.f32 %v264, %v431
  %v569 = vmul.f32 %v269, %v436
  %v570 = vmul.f32 %v272, %v441
  %v571 = vmul.f32 %v277, %v446
  %v572 = vmul.f32 %v280, %v451
  %v573 = vmul.f32 %v285, %v456
  %v574 = vmul.f32 %v288, %v461
  %v575 = vmul.f32 %v293, %v466
  %v576 = vmul.f32 %v296, %v471
  %v577 = vmul.f32 %v301, %v476
  %v578 = vmul.f32 %v304, %v481
  %v579 = vmul.f32 %v309, %v486
  %v580 = vmul.f32 %v312, %v491
  %v581 = vmul.f32 %v317, %v496
  %v582 = vmul.f32 %v320, %v501
  %v583 = vmul.f32 %v325, %v506
  %v584 = vmul.f32 %v328, %v511
  %v585 = vmul.f32 %v333, %v516
  %v586 = vmul.f32 %v336, %v521
  %v587 = vmul.f32 %v341, %v526
  %v588 = vmul.f32 %v344, %v531
  %v589 = vmul.f32 %v349, %v536
  %v590 = vmul.f32 %v352, %v541
  %v591 = vmul.f32 %v357, %v546
  %v592 = vmul.f32 %v360, %v551
  %v593 = vmul.f32 %v365, %v556
  %v594 = vmul.f32 %v368, %v561
  %vm595 = vcmask 64512
  %v596 = vsel %vm595, %v563, 0.0
  %v597 = vsel %vm595, %v564, 0.0
  %v598 = vadd.f32 %v596, %v597
  %v599 = vsel %vm595, %v565, 0.0
  %v600 = vadd.f32 %v598, %v599
  %v601 = vsel %vm595, %v566, 0.0
  %v602 = vadd.f32 %v600, %v601
  %v603 = vsel %vm595, %v567, 0.0
  %v604 = vadd.f32 %v602, %v603
  %v605 = vsel %vm595, %v568, 0.0
  %v606 = vadd.f32 %v604, %v605
  %v607 = vsel %vm595, %v569, 0.0
  %v608 = vadd.f32 %v606, %v607
  %v609 = vsel %vm595, %v570, 0.0
  %v610 = vadd.f32 %v608, %v609
  %v611 = vsel %vm595, %v571, 0.0
  %v612 = vadd.f32 %v610, %v611
  %v613 = vsel %vm595, %v572, 0.0
  %v614 = vadd.f32 %v612, %v613
  %v615 = vsel %vm595, %v573, 0.0
  %v616 = vadd.f32 %v614, %v615
  %v617 = vsel %vm595, %v574, 0.0
  %v618 = vadd.f32 %v616, %v617
  %v619 = vsel %vm595, %v575, 0.0
  %v620 = vadd.f32 %v618, %v619
  %v621 = vsel %vm595, %v576, 0.0
  %v622 = vadd.f32 %v620, %v621
  %v623 = vsel %vm595, %v577, 0.0
  %v624 = vadd.f32 %v622, %v623
  %v625 = vsel %vm595, %v578, 0.0
  %v626 = vadd.f32 %v624, %v625
  %v627 = vsel %vm595, %v579, 0.0
  %v628 = vadd.f32 %v626, %v627
  %v629 = vsel %vm595, %v580, 0.0
  %v630 = vadd.f32 %v628, %v629
  %v631 = vsel %vm595, %v581, 0.0
  %v632 = vadd.f32 %v630, %v631
  %v633 = vsel %vm595, %v582, 0.0
  %v634 = vadd.f32 %v632, %v633
  %v635 = vsel %vm595, %v583, 0.0
  %v636 = vadd.f32 %v634, %v635
  %v637 = vsel %vm595, %v584, 0.0
  %v638 = vadd.f32 %v636, %v637
  %v639 = vsel %vm595, %v585, 0.0
  %v640 = vadd.f32 %v638, %v639
  %v641 = vsel %vm595, %v586, 0.0
  %v642 = vadd.f32 %v640, %v641
  %v643 = vsel %vm595, %v587, 0.0
  %v644 = vadd.f32 %v642, %v643
  %v645 = vsel %vm595, %v588, 0.0
  %v646 = vadd.f32 %v644, %v645
  %v647 = vsel %vm595, %v589, 0.0
  %v648 = vadd.f32 %v646, %v647
  %v649 = vsel %vm595, %v590, 0.0
  %v650 = vadd.f32 %v648, %v649
  %v651 = vsel %vm595, %v591, 0.0
  %v652 = vadd.f32 %v650, %v651
  %v653 = vsel %vm595, %v592, 0.0
  %v654 = vadd.f32 %v652, %v653
  %v655 = vsel %vm595, %v593, 0.0
  %v656 = vadd.f32 %v654, %v655
  %v657 = vsel %vm595, %v594, 0.0
  %v658 = vadd.f32 %v656, %v657
  %v659 = vrot.slane %v658, 4
  %v660 = vadd.f32 %v658, %v659
  %v661 = vrot.slane %v660, 2
  %v662 = vadd.f32 %v660, %v661
  %v663 = vrot.slane %v662, 1
  %v664 = vadd.f32 %v662, %v663
  %v665 = vmul.f32 %v664, 0.0078125
  %v666 = vsub.f32 %v245, %v665
  %v667 = vsub.f32 %v248, %v665
  %v668 = vsub.f32 %v253, %v665
  %v669 = vsub.f32 %v256, %v665
  %v670 = vsub.f32 %v261, %v665
  %v671 = vsub.f32 %v264, %v665
  %v672 = vsub.f32 %v269, %v665
  %v673 = vsub.f32 %v272, %v665
  %v674 = vsub.f32 %v277, %v665
  %v675 = vsub.f32 %v280, %v665
  %v676 = vsub.f32 %v285, %v665
  %v677 = vsub.f32 %v288, %v665
  %v678 = vsub.f32 %v293, %v665
  %v679 = vsub.f32 %v296, %v665
  %v680 = vsub.f32 %v301, %v665
  %v681 = vsub.f32 %v304, %v665
  %v682 = vsub.f32 %v309, %v665
  %v683 = vsub.f32 %v312, %v665
  %v684 = vsub.f32 %v317, %v665
  %v685 = vsub.f32 %v320, %v665
  %v686 = vsub.f32 %v325, %v665
  %v687 = vsub.f32 %v328, %v665
  %v688 = vsub.f32 %v333, %v665
  %v689 = vsub.f32 %v336, %v665
  %v690 = vsub.f32 %v341, %v665
  %v691 = vsub.f32 %v344, %v665
  %v692 = vsub.f32 %v349, %v665
  %v693 = vsub.f32 %v352, %v665
  %v694 = vsub.f32 %v357, %v665
  %v695 = vsub.f32 %v360, %v665
  %v696 = vsub.f32 %v365, %v665
  %v697 = vsub.f32 %v368, %v665
  %v698 = vmul.f32 %v666, %v406
  %v699 = vmul.f32 %v667, %v411
  %v700 = vmul.f32 %v668, %v416
  %v701 = vmul.f32 %v669, %v421
  %v702 = vmul.f32 %v670, %v426
  %v703 = vmul.f32 %v671, %v431
  %v704 = vmul.f32 %v672, %v436
  %v705 = vmul.f32 %v673, %v441
  %v706 = vmul.f32 %v674, %v446
  %v707 = vmul.f32 %v675, %v451
  %v708 = vmul.f32 %v676, %v456
  %v709 = vmul.f32 %v677, %v461
  %v710 = vmul.f32 %v678, %v466
  %v711 = vmul.f32 %v679, %v471
  %v712 = vmul.f32 %v680, %v476
  %v713 = vmul.f32 %v681, %v481
  %v714 = vmul.f32 %v682, %v486
  %v715 = vmul.f32 %v683, %v491
  %v716 = vmul.f32 %v684, %v496
  %v717 = vmul.f32 %v685, %v501
  %v718 = vmul.f32 %v686, %v506
  %v719 = vmul.f32 %v687, %v511
  %v720 = vmul.f32 %v688, %v516
  %v721 = vmul.f32 %v689, %v521
  %v722 = vmul.f32 %v690, %v526
  %v723 = vmul.f32 %v691, %v531
  %v724 = vmul.f32 %v692, %v536
  %v725 = vmul.f32 %v693, %v541
  %v726 = vmul.f32 %v694, %v546
  %v727 = vmul.f32 %v695, %v551
  %v728 = vmul.f32 %v696, %v556
  %v729 = vmul.f32 %v697, %v561
  %v730 = vmul.f32 %v698, %v698
  %v731 = vmul.f32 %v699, %v699
  %v732 = vmul.f32 %v700, %v700
  %v733 = vmul.f32 %v701, %v701
  %v734 = vmul.f32 %v702, %v702
  %v735 = vmul.f32 %v703, %v703
  %v736 = vmul.f32 %v704, %v704
  %v737 = vmul.f32 %v705, %v705
  %v738 = vmul.f32 %v706, %v706
  %v739 = vmul.f32 %v707, %v707
  %v740 = vmul.f32 %v708, %v708
  %v741 = vmul.f32 %v709, %v709
  %v742 = vmul.f32 %v710, %v710
  %v743 = vmul.f32 %v711, %v711
  %v744 = vmul.f32 %v712, %v712
  %v745 = vmul.f32 %v713, %v713
  %v746 = vmul.f32 %v714, %v714
  %v747 = vmul.f32 %v715, %v715
  %v748 = vmul.f32 %v716, %v716
  %v749 = vmul.f32 %v717, %v717
  %v750 = vmul.f32 %v718, %v718
  %v751 = vmul.f32 %v719, %v719
  %v752 = vmul.f32 %v720, %v720
  %v753 = vmul.f32 %v721, %v721
  %v754 = vmul.f32 %v722, %v722
  %v755 = vmul.f32 %v723, %v723
  %v756 = vmul.f32 %v724, %v724
  %v757 = vmul.f32 %v725, %v725
  %v758 = vmul.f32 %v726, %v726
  %v759 = vmul.f32 %v727, %v727
  %v760 = vmul.f32 %v728, %v728
  %v761 = vmul.f32 %v729, %v729
  %v762 = vsel %vm595, %v730, 0.0
  %v763 = vsel %vm595, %v731, 0.0
  %v764 = vadd.f32 %v762, %v763
  %v765 = vsel %vm595, %v732, 0.0
  %v766 = vadd.f32 %v764, %v765
  %v767 = vsel %vm595, %v733, 0.0
  %v768 = vadd.f32 %v766, %v767
  %v769 = vsel %vm595, %v734, 0.0
  %v770 = vadd.f32 %v768, %v769
  %v771 = vsel %vm595, %v735, 0.0
  %v772 = vadd.f32 %v770, %v771
  %v773 = vsel %vm595, %v736, 0.0
  %v774 = vadd.f32 %v772, %v773
  %v775 = vsel %vm595, %v737, 0.0
  %v776 = vadd.f32 %v774, %v775
  %v777 = vsel %vm595, %v738, 0.0
  %v778 = vadd.f32 %v776, %v777
  %v779 = vsel %vm595, %v739, 0.0
  %v780 = vadd.f32 %v778, %v779
  %v781 = vsel %vm595, %v740, 0.0
  %v782 = vadd.f32 %v780, %v781
  %v783 = vsel %vm595, %v741, 0.0
  %v784 = vadd.f32 %v782, %v783
  %v785 = vsel %vm595, %v742, 0.0
  %v786 = vadd.f32 %v784, %v785
  %v787 = vsel %vm595, %v743, 0.0
  %v788 = vadd.f32 %v786, %v787
  %v789 = vsel %vm595, %v744, 0.0
  %v790 = vadd.f32 %v788, %v789
  %v791 = vsel %vm595, %v745, 0.0
  %v792 = vadd.f32 %v790, %v791
  %v793 = vsel %vm595, %v746, 0.0
  %v794 = vadd.f32 %v792, %v793
  %v795 = vsel %vm595, %v747, 0.0
  %v796 = vadd.f32 %v794, %v795
  %v797 = vsel %vm595, %v748, 0.0
  %v798 = vadd.f32 %v796, %v797
  %v799 = vsel %vm595, %v749, 0.0
  %v800 = vadd.f32 %v798, %v799
  %v801 = vsel %vm595, %v750, 0.0
  %v802 = vadd.f32 %v800, %v801
  %v803 = vsel %vm595, %v751, 0.0
  %v804 = vadd.f32 %v802, %v803
  %v805 = vsel %vm595, %v752, 0.0
  %v806 = vadd.f32 %v804, %v805
  %v807 = vsel %vm595, %v753, 0.0
  %v808 = vadd.f32 %v806, %v807
  %v809 = vsel %vm595, %v754, 0.0
  %v810 = vadd.f32 %v808, %v809
  %v811 = vsel %vm595, %v755, 0.0
  %v812 = vadd.f32 %v810, %v811
  %v813 = vsel %vm595, %v756, 0.0
  %v814 = vadd.f32 %v812, %v813
  %v815 = vsel %vm595, %v757, 0.0
  %v816 = vadd.f32 %v814, %v815
  %v817 = vsel %vm595, %v758, 0.0
  %v818 = vadd.f32 %v816, %v817
  %v819 = vsel %vm595, %v759, 0.0
  %v820 = vadd.f32 %v818, %v819
  %v821 = vsel %vm595, %v760, 0.0
  %v822 = vadd.f32 %v820, %v821
  %v823 = vsel %vm595, %v761, 0.0
  %v824 = vadd.f32 %v822, %v823
  %v825 = vrot.slane %v824, 4
  %v826 = vadd.f32 %v824, %v825
  %v827 = vrot.slane %v826, 2
  %v828 = vadd.f32 %v826, %v827
  %v829 = vrot.slane %v828, 1
  %v830 = vadd.f32 %v828, %v829
  %v831 = vmul.f32 %v830, 0.0078125
  %v832 = vld [vmem:[%s2] sm:$0x1]
  %v833 = vadd.f32 %v831, 1e-05
  %v834 = vrsqrt.pop %v833
  %v835 = vmul.f32 %v832, %v834
  %v837 = vlaneseq
  %v838 = vshrl.u32 %v837, 7
  %v839 = vsub.s32 0, %v838
  %v840 = vrot.slane %v835, %v839
  %v842 = vmul.f32 %v666, %v840
  %v843 = vmul.f32 %v667, %v840
  %v844 = vmul.f32 %v668, %v840
  %v845 = vmul.f32 %v669, %v840
  %v846 = vmul.f32 %v670, %v840
  %v847 = vmul.f32 %v671, %v840
  %v848 = vmul.f32 %v672, %v840
  %v849 = vmul.f32 %v673, %v840
  %v850 = vmul.f32 %v674, %v840
  %v851 = vmul.f32 %v675, %v840
  %v852 = vmul.f32 %v676, %v840
  %v853 = vmul.f32 %v677, %v840
  %v854 = vmul.f32 %v678, %v840
  %v855 = vmul.f32 %v679, %v840
  %v856 = vmul.f32 %v680, %v840
  %v857 = vmul.f32 %v681, %v840
  %v858 = vmul.f32 %v682, %v840
  %v859 = vmul.f32 %v683, %v840
  %v860 = vmul.f32 %v684, %v840
  %v861 = vmul.f32 %v685, %v840
  %v862 = vmul.f32 %v686, %v840
  %v863 = vmul.f32 %v687, %v840
  %v864 = vmul.f32 %v688, %v840
  %v865 = vmul.f32 %v689, %v840
  %v866 = vmul.f32 %v690, %v840
  %v867 = vmul.f32 %v691, %v840
  %v868 = vmul.f32 %v692, %v840
  %v869 = vmul.f32 %v693, %v840
  %v870 = vmul.f32 %v694, %v840
  %v871 = vmul.f32 %v695, %v840
  %v872 = vmul.f32 %v696, %v840
  %v873 = vmul.f32 %v697, %v840
  %v874 = vld [vmem:[%s3] sm:$0x1]
  %v876 = vlaneseq
  %v877 = vshrl.u32 %v876, 7
  %v878 = vsub.s32 0, %v877
  %v879 = vrot.slane %v874, %v878
  %v881 = vadd.f32 %v842, %v879
  %v882 = vadd.f32 %v843, %v879
  %v883 = vadd.f32 %v844, %v879
  %v884 = vadd.f32 %v845, %v879
  %v885 = vadd.f32 %v846, %v879
  %v886 = vadd.f32 %v847, %v879
  %v887 = vadd.f32 %v848, %v879
  %v888 = vadd.f32 %v849, %v879
  %v889 = vadd.f32 %v850, %v879
  %v890 = vadd.f32 %v851, %v879
  %v891 = vadd.f32 %v852, %v879
  %v892 = vadd.f32 %v853, %v879
  %v893 = vadd.f32 %v854, %v879
  %v894 = vadd.f32 %v855, %v879
  %v895 = vadd.f32 %v856, %v879
  %v896 = vadd.f32 %v857, %v879
  %v897 = vadd.f32 %v858, %v879
  %v898 = vadd.f32 %v859, %v879
  %v899 = vadd.f32 %v860, %v879
  %v900 = vadd.f32 %v861, %v879
  %v901 = vadd.f32 %v862, %v879
  %v902 = vadd.f32 %v863, %v879
  %v903 = vadd.f32 %v864, %v879
  %v904 = vadd.f32 %v865, %v879
  %v905 = vadd.f32 %v866, %v879
  %v906 = vadd.f32 %v867, %v879
  %v907 = vadd.f32 %v868, %v879
  %v908 = vadd.f32 %v869, %v879
  %v909 = vadd.f32 %v870, %v879
  %v910 = vadd.f32 %v871, %v879
  %v911 = vadd.f32 %v872, %v879
  %v912 = vadd.f32 %v873, %v879
  %vm913 = vcmp.gt.f32.partialorder %v881, 0.0
  %vm914 = vcmp.gt.f32.partialorder %v882, 0.0
  %vm915 = vcmp.gt.f32.partialorder %v883, 0.0
  %vm916 = vcmp.gt.f32.partialorder %v884, 0.0
  %vm917 = vcmp.gt.f32.partialorder %v885, 0.0
  %vm918 = vcmp.gt.f32.partialorder %v886, 0.0
  %vm919 = vcmp.gt.f32.partialorder %v887, 0.0
  %vm920 = vcmp.gt.f32.partialorder %v888, 0.0
  %vm921 = vcmp.gt.f32.partialorder %v889, 0.0
  %vm922 = vcmp.gt.f32.partialorder %v890, 0.0
  %vm923 = vcmp.gt.f32.partialorder %v891, 0.0
  %vm924 = vcmp.gt.f32.partialorder %v892, 0.0
  %vm925 = vcmp.gt.f32.partialorder %v893, 0.0
  %vm926 = vcmp.gt.f32.partialorder %v894, 0.0
  %vm927 = vcmp.gt.f32.partialorder %v895, 0.0
  %vm928 = vcmp.gt.f32.partialorder %v896, 0.0
  %vm929 = vcmp.gt.f32.partialorder %v897, 0.0
  %vm930 = vcmp.gt.f32.partialorder %v898, 0.0
  %vm931 = vcmp.gt.f32.partialorder %v899, 0.0
  %vm932 = vcmp.gt.f32.partialorder %v900, 0.0
  %vm933 = vcmp.gt.f32.partialorder %v901, 0.0
  %vm934 = vcmp.gt.f32.partialorder %v902, 0.0
  %vm935 = vcmp.gt.f32.partialorder %v903, 0.0
  %vm936 = vcmp.gt.f32.partialorder %v904, 0.0
  %vm937 = vcmp.gt.f32.partialorder %v905, 0.0
  %vm938 = vcmp.gt.f32.partialorder %v906, 0.0
  %vm939 = vcmp.gt.f32.partialorder %v907, 0.0
  %vm940 = vcmp.gt.f32.partialorder %v908, 0.0
  %vm941 = vcmp.gt.f32.partialorder %v909, 0.0
  %vm942 = vcmp.gt.f32.partialorder %v910, 0.0
  %vm943 = vcmp.gt.f32.partialorder %v911, 0.0
  %vm944 = vcmp.gt.f32.partialorder %v912, 0.0
  %v945 = vmul.f32 %v881, 0.2
  %v946 = vmul.f32 %v882, 0.2
  %v947 = vmul.f32 %v883, 0.2
  %v948 = vmul.f32 %v884, 0.2
  %v949 = vmul.f32 %v885, 0.2
  %v950 = vmul.f32 %v886, 0.2
  %v951 = vmul.f32 %v887, 0.2
  %v952 = vmul.f32 %v888, 0.2
  %v953 = vmul.f32 %v889, 0.2
  %v954 = vmul.f32 %v890, 0.2
  %v955 = vmul.f32 %v891, 0.2
  %v956 = vmul.f32 %v892, 0.2
  %v957 = vmul.f32 %v893, 0.2
  %v958 = vmul.f32 %v894, 0.2
  %v959 = vmul.f32 %v895, 0.2
  %v960 = vmul.f32 %v896, 0.2
  %v961 = vmul.f32 %v897, 0.2
  %v962 = vmul.f32 %v898, 0.2
  %v963 = vmul.f32 %v899, 0.2
  %v964 = vmul.f32 %v900, 0.2
  %v965 = vmul.f32 %v901, 0.2
  %v966 = vmul.f32 %v902, 0.2
  %v967 = vmul.f32 %v903, 0.2
  %v968 = vmul.f32 %v904, 0.2
  %v969 = vmul.f32 %v905, 0.2
  %v970 = vmul.f32 %v906, 0.2
  %v971 = vmul.f32 %v907, 0.2
  %v972 = vmul.f32 %v908, 0.2
  %v973 = vmul.f32 %v909, 0.2
  %v974 = vmul.f32 %v910, 0.2
  %v975 = vmul.f32 %v911, 0.2
  %v976 = vmul.f32 %v912, 0.2
  %v977 = vsel %vm913, %v881, %v945
  %v978 = vsel %vm914, %v882, %v946
  %v979 = vsel %vm915, %v883, %v947
  %v980 = vsel %vm916, %v884, %v948
  %v981 = vsel %vm917, %v885, %v949
  %v982 = vsel %vm918, %v886, %v950
  %v983 = vsel %vm919, %v887, %v951
  %v984 = vsel %vm920, %v888, %v952
  %v985 = vsel %vm921, %v889, %v953
  %v986 = vsel %vm922, %v890, %v954
  %v987 = vsel %vm923, %v891, %v955
  %v988 = vsel %vm924, %v892, %v956
  %v989 = vsel %vm925, %v893, %v957
  %v990 = vsel %vm926, %v894, %v958
  %v991 = vsel %vm927, %v895, %v959
  %v992 = vsel %vm928, %v896, %v960
  %v993 = vsel %vm929, %v897, %v961
  %v994 = vsel %vm930, %v898, %v962
  %v995 = vsel %vm931, %v899, %v963
  %v996 = vsel %vm932, %v900, %v964
  %v997 = vsel %vm933, %v901, %v965
  %v998 = vsel %vm934, %v902, %v966
  %v999 = vsel %vm935, %v903, %v967
  %v1000 = vsel %vm936, %v904, %v968
  %v1001 = vsel %vm937, %v905, %v969
  %v1002 = vsel %vm938, %v906, %v970
  %v1003 = vsel %vm939, %v907, %v971
  %v1004 = vsel %vm940, %v908, %v972
  %v1005 = vsel %vm941, %v909, %v973
  %v1006 = vsel %vm942, %v910, %v974
  %v1007 = vsel %vm943, %v911, %v975
  %v1008 = vsel %vm944, %v912, %v976
  %v1009 = vmul.f32 %v977, %v406
  %v1010 = vmul.f32 %v978, %v411
  %v1011 = vmul.f32 %v979, %v416
  %v1012 = vmul.f32 %v980, %v421
  %v1013 = vmul.f32 %v981, %v426
  %v1014 = vmul.f32 %v982, %v431
  %v1015 = vmul.f32 %v983, %v436
  %v1016 = vmul.f32 %v984, %v441
  %v1017 = vmul.f32 %v985, %v446
  %v1018 = vmul.f32 %v986, %v451
  %v1019 = vmul.f32 %v987, %v456
  %v1020 = vmul.f32 %v988, %v461
  %v1021 = vmul.f32 %v989, %v466
  %v1022 = vmul.f32 %v990, %v471
  %v1023 = vmul.f32 %v991, %v476
  %v1024 = vmul.f32 %v992, %v481
  %v1025 = vmul.f32 %v993, %v486
  %v1026 = vmul.f32 %v994, %v491
  %v1027 = vmul.f32 %v995, %v496
  %v1028 = vmul.f32 %v996, %v501
  %v1029 = vmul.f32 %v997, %v506
  %v1030 = vmul.f32 %v998, %v511
  %v1031 = vmul.f32 %v999, %v516
  %v1032 = vmul.f32 %v1000, %v521
  %v1033 = vmul.f32 %v1001, %v526
  %v1034 = vmul.f32 %v1002, %v531
  %v1035 = vmul.f32 %v1003, %v536
  %v1036 = vmul.f32 %v1004, %v541
  %v1037 = vmul.f32 %v1005, %v546
  %v1038 = vmul.f32 %v1006, %v551
  %v1039 = vmul.f32 %v1007, %v556
  %v1040 = vmul.f32 %v1008, %v561
  %1041 = vst.msk [vmem:[#allocation2] sm:$0xff] %vm595, %v1009
  %1042 = vst.msk [vmem:[#allocation2 + $0x8] sm:$0xff] %vm595, %v1010
  %1043 = vst.msk [vmem:[#allocation2 + $0x10] sm:$0xff] %vm595, %v1011
  %1044 = vst.msk [vmem:[#allocation2 + $0x18] sm:$0xff] %vm595, %v1012
  %1045 = vst.msk [vmem:[#allocation2 + $0x20] sm:$0xff] %vm595, %v1013
  %1046 = vst.msk [vmem:[#allocation2 + $0x28] sm:$0xff] %vm595, %v1014
  %1047 = vst.msk [vmem:[#allocation2 + $0x30] sm:$0xff] %vm595, %v1015
  %1048 = vst.msk [vmem:[#allocation2 + $0x38] sm:$0xff] %vm595, %v1016
  %1057 = vrot.lane.b32.xlu0 %v1017, 8
  %v1058 = vpop.permute.xlu0 %1057
  %1059 = vrot.lane.b32.xlu0 %v1018, 8
  %v1060 = vpop.permute.xlu0 %1059
  %1061 = vrot.lane.b32.xlu0 %v1019, 8
  %v1062 = vpop.permute.xlu0 %1061
  %1063 = vrot.lane.b32.xlu0 %v1020, 8
  %v1064 = vpop.permute.xlu0 %1063
  %1065 = vrot.lane.b32.xlu0 %v1021, 8
  %v1066 = vpop.permute.xlu0 %1065
  %1067 = vrot.lane.b32.xlu0 %v1022, 8
  %v1068 = vpop.permute.xlu0 %1067
  %1069 = vrot.lane.b32.xlu0 %v1023, 8
  %v1070 = vpop.permute.xlu0 %1069
  %1071 = vrot.lane.b32.xlu0 %v1024, 8
  %v1072 = vpop.permute.xlu0 %1071
  %vm1081 = vcmask 130112
  %1082 = vst.msk [vmem:[#allocation2] sm:$0xff] %vm1081, %v1058
  %1083 = vst.msk [vmem:[#allocation2 + $0x8] sm:$0xff] %vm1081, %v1060
  %1084 = vst.msk [vmem:[#allocation2 + $0x10] sm:$0xff] %vm1081, %v1062
  %1085 = vst.msk [vmem:[#allocation2 + $0x18] sm:$0xff] %vm1081, %v1064
  %1086 = vst.msk [vmem:[#allocation2 + $0x20] sm:$0xff] %vm1081, %v1066
  %1087 = vst.msk [vmem:[#allocation2 + $0x28] sm:$0xff] %vm1081, %v1068
  %1088 = vst.msk [vmem:[#allocation2 + $0x30] sm:$0xff] %vm1081, %v1070
  %1089 = vst.msk [vmem:[#allocation2 + $0x38] sm:$0xff] %vm1081, %v1072
  %1098 = vrot.lane.b32.xlu0 %v1025, 16
  %v1099 = vpop.permute.xlu0 %1098
  %1100 = vrot.lane.b32.xlu0 %v1026, 16
  %v1101 = vpop.permute.xlu0 %1100
  %1102 = vrot.lane.b32.xlu0 %v1027, 16
  %v1103 = vpop.permute.xlu0 %1102
  %1104 = vrot.lane.b32.xlu0 %v1028, 16
  %v1105 = vpop.permute.xlu0 %1104
  %1106 = vrot.lane.b32.xlu0 %v1029, 16
  %v1107 = vpop.permute.xlu0 %1106
  %1108 = vrot.lane.b32.xlu0 %v1030, 16
  %v1109 = vpop.permute.xlu0 %1108
  %1110 = vrot.lane.b32.xlu0 %v1031, 16
  %v1111 = vpop.permute.xlu0 %1110
  %1112 = vrot.lane.b32.xlu0 %v1032, 16
  %v1113 = vpop.permute.xlu0 %1112
  %vm1122 = vcmask 195712
  %1123 = vst.msk [vmem:[#allocation2] sm:$0xff] %vm1122, %v1099
  %1124 = vst.msk [vmem:[#allocation2 + $0x8] sm:$0xff] %vm1122, %v1101
  %1125 = vst.msk [vmem:[#allocation2 + $0x10] sm:$0xff] %vm1122, %v1103
  %1126 = vst.msk [vmem:[#allocation2 + $0x18] sm:$0xff] %vm1122, %v1105
  %1127 = vst.msk [vmem:[#allocation2 + $0x20] sm:$0xff] %vm1122, %v1107
  %1128 = vst.msk [vmem:[#allocation2 + $0x28] sm:$0xff] %vm1122, %v1109
  %1129 = vst.msk [vmem:[#allocation2 + $0x30] sm:$0xff] %vm1122, %v1111
  %1130 = vst.msk [vmem:[#allocation2 + $0x38] sm:$0xff] %vm1122, %v1113
  %1139 = vrot.lane.b32.xlu0 %v1033, 24
  %v1140 = vpop.permute.xlu0 %1139
  %1141 = vrot.lane.b32.xlu0 %v1034, 24
  %v1142 = vpop.permute.xlu0 %1141
  %1143 = vrot.lane.b32.xlu0 %v1035, 24
  %v1144 = vpop.permute.xlu0 %1143
  %1145 = vrot.lane.b32.xlu0 %v1036, 24
  %v1146 = vpop.permute.xlu0 %1145
  %1147 = vrot.lane.b32.xlu0 %v1037, 24
  %v1148 = vpop.permute.xlu0 %1147
  %1149 = vrot.lane.b32.xlu0 %v1038, 24
  %v1150 = vpop.permute.xlu0 %1149
  %1151 = vrot.lane.b32.xlu0 %v1039, 24
  %v1152 = vpop.permute.xlu0 %1151
  %1153 = vrot.lane.b32.xlu0 %v1040, 24
  %v1154 = vpop.permute.xlu0 %1153
  %vm1163 = vcmask 261312
  %1164 = vst.msk [vmem:[#allocation2] sm:$0xff] %vm1163, %v1140
  %1165 = vst.msk [vmem:[#allocation2 + $0x8] sm:$0xff] %vm1163, %v1142
  %1166 = vst.msk [vmem:[#allocation2 + $0x10] sm:$0xff] %vm1163, %v1144
  %1167 = vst.msk [vmem:[#allocation2 + $0x18] sm:$0xff] %vm1163, %v1146
  %1168 = vst.msk [vmem:[#allocation2 + $0x20] sm:$0xff] %vm1163, %v1148
  %1169 = vst.msk [vmem:[#allocation2 + $0x28] sm:$0xff] %vm1163, %v1150
  %1170 = vst.msk [vmem:[#allocation2 + $0x30] sm:$0xff] %vm1163, %v1152
  %1171 = vst.msk [vmem:[#allocation2 + $0x38] sm:$0xff] %vm1163, %v1154
  %v1172 = vld [vmem:[#allocation2] sm:$0xff]
  %v1173 = vld [vmem:[#allocation2 + $0x8] sm:$0xff]
  %v1174 = vld [vmem:[#allocation2 + $0x10] sm:$0xff]
  %v1175 = vld [vmem:[#allocation2 + $0x18] sm:$0xff]
  %v1176 = vld [vmem:[#allocation2 + $0x20] sm:$0xff]
  %v1177 = vld [vmem:[#allocation2 + $0x28] sm:$0xff]
  %v1178 = vld [vmem:[#allocation2 + $0x30] sm:$0xff]
  %v1179 = vpack.c.bf16 %v1173, %v1172
  %v1180 = vpack.c.bf16 %v1175, %v1174
  %v1181 = vpack.c.bf16 %v1177, %v1176
  %v1182 = vpack.c.bf16 %v1178, %v1178
  %v1187 = vunpack.c.l.b16 %v1179
  %v1188 = vunpack.c.h.b16 %v1179
  %v1189 = vunpack.c.l.b16 %v1180
  %v1190 = vunpack.c.h.b16 %v1180
  %v1191 = vunpack.c.l.b16 %v1181
  %v1192 = vunpack.c.h.b16 %v1181
  %v1193 = vunpack.c.l.b16 %v1182
  %v1194 = vpack.c.b16 %v1187, %v1187
  %v1195 = vpack.c.b16 %v1188, %v1188
  %v1196 = vpack.c.b16 %v1189, %v1189
  %v1197 = vpack.c.b16 %v1190, %v1190
  %v1198 = vpack.c.b16 %v1191, %v1191
  %v1199 = vpack.c.b16 %v1192, %v1192
  %v1200 = vpack.c.b16 %v1193, %v1193
  %vm1208 = vcmask 257024
  %1209 = vst.msk [vmem:[#allocation3] sm:$0xf] %vm1208, %v1194
  %1210 = vst.msk [vmem:[#allocation3 + $0x4] sm:$0xf] %vm1208, %v1195
  %1211 = vst.msk [vmem:[#allocation3 + $0x8] sm:$0xf] %vm1208, %v1196
  %1212 = vst.msk [vmem:[#allocation3 + $0xc] sm:$0xf] %vm1208, %v1197
  %1213 = vst.msk [vmem:[#allocation3 + $0x10] sm:$0xf] %vm1208, %v1198
  %1214 = vst.msk [vmem:[#allocation3 + $0x14] sm:$0xf] %vm1208, %v1199
  %1215 = vst.msk [vmem:[#allocation3 + $0x18] sm:$0xf] %vm1208, %v1200
  %v1216 = vld [vmem:[#allocation2 + $0x1] sm:$0xff]
  %v1217 = vld [vmem:[#allocation2 + $0x9] sm:$0xff]
  %v1218 = vld [vmem:[#allocation2 + $0x11] sm:$0xff]
  %v1219 = vld [vmem:[#allocation2 + $0x19] sm:$0xff]
  %v1220 = vld [vmem:[#allocation2 + $0x21] sm:$0xff]
  %v1221 = vld [vmem:[#allocation2 + $0x29] sm:$0xff]
  %v1222 = vld [vmem:[#allocation2 + $0x31] sm:$0xff]
  %v1223 = vpack.c.bf16 %v1217, %v1216
  %v1224 = vpack.c.bf16 %v1219, %v1218
  %v1225 = vpack.c.bf16 %v1221, %v1220
  %v1226 = vpack.c.bf16 %v1222, %v1222
  %v1231 = vunpack.c.l.b16 %v1223
  %v1232 = vunpack.c.h.b16 %v1223
  %v1233 = vunpack.c.l.b16 %v1224
  %v1234 = vunpack.c.h.b16 %v1224
  %v1235 = vunpack.c.l.b16 %v1225
  %v1236 = vunpack.c.h.b16 %v1225
  %v1237 = vunpack.c.l.b16 %v1226
  %v1238 = vpack.c.b16 %v1231, %v1231
  %v1239 = vpack.c.b16 %v1232, %v1232
  %v1240 = vpack.c.b16 %v1233, %v1233
  %v1241 = vpack.c.b16 %v1234, %v1234
  %v1242 = vpack.c.b16 %v1235, %v1235
  %v1243 = vpack.c.b16 %v1236, %v1236
  %v1244 = vpack.c.b16 %v1237, %v1237
  %1245 = vrot.lane.b32.xlu0 %v1238, 32
  %v1246 = vpop.permute.xlu0 %1245
  %1247 = vrot.lane.b32.xlu0 %v1239, 32
  %v1248 = vpop.permute.xlu0 %1247
  %1249 = vrot.lane.b32.xlu0 %v1240, 32
  %v1250 = vpop.permute.xlu0 %1249
  %1251 = vrot.lane.b32.xlu0 %v1241, 32
  %v1252 = vpop.permute.xlu0 %1251
  %1253 = vrot.lane.b32.xlu0 %v1242, 32
  %v1254 = vpop.permute.xlu0 %1253
  %1255 = vrot.lane.b32.xlu0 %v1243, 32
  %v1256 = vpop.permute.xlu0 %1255
  %1257 = vrot.lane.b32.xlu0 %v1244, 32
  %v1258 = vpop.permute.xlu0 %1257
  %vm1266 = vcmask 519424
  %1267 = vst.msk [vmem:[#allocation3] sm:$0xf] %vm1266, %v1246
  %1268 = vst.msk [vmem:[#allocation3 + $0x4] sm:$0xf] %vm1266, %v1248
  %1269 = vst.msk [vmem:[#allocation3 + $0x8] sm:$0xf] %vm1266, %v1250
  %1270 = vst.msk [vmem:[#allocation3 + $0xc] sm:$0xf] %vm1266, %v1252
  %1271 = vst.msk [vmem:[#allocation3 + $0x10] sm:$0xf] %vm1266, %v1254
  %1272 = vst.msk [vmem:[#allocation3 + $0x14] sm:$0xf] %vm1266, %v1256
  %1273 = vst.msk [vmem:[#allocation3 + $0x18] sm:$0xf] %vm1266, %v1258
  %v1274 = vld [vmem:[#allocation2 + $0x5] sm:$0xff]
  %v1275 = vld [vmem:[#allocation2 + $0xd] sm:$0xff]
  %v1276 = vld [vmem:[#allocation2 + $0x15] sm:$0xff]
  %v1277 = vld [vmem:[#allocation2 + $0x1d] sm:$0xff]
  %v1278 = vld [vmem:[#allocation2 + $0x25] sm:$0xff]
  %v1279 = vld [vmem:[#allocation2 + $0x2d] sm:$0xff]
  %v1280 = vld [vmem:[#allocation2 + $0x35] sm:$0xff]
  %v1281 = vpack.c.bf16 %v1275, %v1274
  %v1282 = vpack.c.bf16 %v1277, %v1276
  %v1283 = vpack.c.bf16 %v1279, %v1278
  %v1284 = vpack.c.bf16 %v1280, %v1280
  %v1289 = vunpack.c.l.b16 %v1281
  %v1290 = vunpack.c.h.b16 %v1281
  %v1291 = vunpack.c.l.b16 %v1282
  %v1292 = vunpack.c.h.b16 %v1282
  %v1293 = vunpack.c.l.b16 %v1283
  %v1294 = vunpack.c.h.b16 %v1283
  %v1295 = vunpack.c.l.b16 %v1284
  %v1296 = vpack.c.b16 %v1289, %v1289
  %v1297 = vpack.c.b16 %v1290, %v1290
  %v1298 = vpack.c.b16 %v1291, %v1291
  %v1299 = vpack.c.b16 %v1292, %v1292
  %v1300 = vpack.c.b16 %v1293, %v1293
  %v1301 = vpack.c.b16 %v1294, %v1294
  %v1302 = vpack.c.b16 %v1295, %v1295
  %1303 = vrot.lane.b32.xlu0 %v1296, 64
  %v1304 = vpop.permute.xlu0 %1303
  %1305 = vrot.lane.b32.xlu0 %v1297, 64
  %v1306 = vpop.permute.xlu0 %1305
  %1307 = vrot.lane.b32.xlu0 %v1298, 64
  %v1308 = vpop.permute.xlu0 %1307
  %1309 = vrot.lane.b32.xlu0 %v1299, 64
  %v1310 = vpop.permute.xlu0 %1309
  %1311 = vrot.lane.b32.xlu0 %v1300, 64
  %v1312 = vpop.permute.xlu0 %1311
  %1313 = vrot.lane.b32.xlu0 %v1301, 64
  %v1314 = vpop.permute.xlu0 %1313
  %1315 = vrot.lane.b32.xlu0 %v1302, 64
  %v1316 = vpop.permute.xlu0 %1315
  %vm1324 = vcmask 781824
  %1325 = vst.msk [vmem:[#allocation3] sm:$0xf] %vm1324, %v1304
  %1326 = vst.msk [vmem:[#allocation3 + $0x4] sm:$0xf] %vm1324, %v1306
  %1327 = vst.msk [vmem:[#allocation3 + $0x8] sm:$0xf] %vm1324, %v1308
  %1328 = vst.msk [vmem:[#allocation3 + $0xc] sm:$0xf] %vm1324, %v1310
  %1329 = vst.msk [vmem:[#allocation3 + $0x10] sm:$0xf] %vm1324, %v1312
  %1330 = vst.msk [vmem:[#allocation3 + $0x14] sm:$0xf] %vm1324, %v1314
  %1331 = vst.msk [vmem:[#allocation3 + $0x18] sm:$0xf] %vm1324, %v1316
  %v1332 = vld [vmem:[#allocation2 + $0x6] sm:$0xff]
  %v1333 = vld [vmem:[#allocation2 + $0xe] sm:$0xff]
  %v1334 = vld [vmem:[#allocation2 + $0x16] sm:$0xff]
  %v1335 = vld [vmem:[#allocation2 + $0x1e] sm:$0xff]
  %v1336 = vld [vmem:[#allocation2 + $0x26] sm:$0xff]
  %v1337 = vld [vmem:[#allocation2 + $0x2e] sm:$0xff]
  %v1338 = vld [vmem:[#allocation2 + $0x36] sm:$0xff]
  %v1339 = vpack.c.bf16 %v1333, %v1332
  %v1340 = vpack.c.bf16 %v1335, %v1334
  %v1341 = vpack.c.bf16 %v1337, %v1336
  %v1342 = vpack.c.bf16 %v1338, %v1338
  %v1347 = vunpack.c.l.b16 %v1339
  %v1348 = vunpack.c.h.b16 %v1339
  %v1349 = vunpack.c.l.b16 %v1340
  %v1350 = vunpack.c.h.b16 %v1340
  %v1351 = vunpack.c.l.b16 %v1341
  %v1352 = vunpack.c.h.b16 %v1341
  %v1353 = vunpack.c.l.b16 %v1342
  %v1354 = vpack.c.b16 %v1347, %v1347
  %v1355 = vpack.c.b16 %v1348, %v1348
  %v1356 = vpack.c.b16 %v1349, %v1349
  %v1357 = vpack.c.b16 %v1350, %v1350
  %v1358 = vpack.c.b16 %v1351, %v1351
  %v1359 = vpack.c.b16 %v1352, %v1352
  %v1360 = vpack.c.b16 %v1353, %v1353
  %1361 = vrot.lane.b32.xlu0 %v1354, 96
  %v1362 = vpop.permute.xlu0 %1361
  %1363 = vrot.lane.b32.xlu0 %v1355, 96
  %v1364 = vpop.permute.xlu0 %1363
  %1365 = vrot.lane.b32.xlu0 %v1356, 96
  %v1366 = vpop.permute.xlu0 %1365
  %1367 = vrot.lane.b32.xlu0 %v1357, 96
  %v1368 = vpop.permute.xlu0 %1367
  %1369 = vrot.lane.b32.xlu0 %v1358, 96
  %v1370 = vpop.permute.xlu0 %1369
  %1371 = vrot.lane.b32.xlu0 %v1359, 96
  %v1372 = vpop.permute.xlu0 %1371
  %1373 = vrot.lane.b32.xlu0 %v1360, 96
  %v1374 = vpop.permute.xlu0 %1373
  %vm1382 = vcmask 1044224
  %1383 = vst.msk [vmem:[#allocation3] sm:$0xf] %vm1382, %v1362
  %1384 = vst.msk [vmem:[#allocation3 + $0x4] sm:$0xf] %vm1382, %v1364
  %1385 = vst.msk [vmem:[#allocation3 + $0x8] sm:$0xf] %vm1382, %v1366
  %1386 = vst.msk [vmem:[#allocation3 + $0xc] sm:$0xf] %vm1382, %v1368
  %1387 = vst.msk [vmem:[#allocation3 + $0x10] sm:$0xf] %vm1382, %v1370
  %1388 = vst.msk [vmem:[#allocation3 + $0x14] sm:$0xf] %vm1382, %v1372
  %1389 = vst.msk [vmem:[#allocation3 + $0x18] sm:$0xf] %vm1382, %v1374
  %v1390 = vld [vmem:[#allocation3] sm:$0xf]
  %v1391 = vld [vmem:[#allocation3 + $0x4] sm:$0xf]
  %v1392 = vld [vmem:[#allocation3 + $0x8] sm:$0xf]
  %v1393 = vld [vmem:[#allocation3 + $0xc] sm:$0xf]
  %v1394 = vld [vmem:[#allocation3 + $0x10] sm:$0xf]
  %v1395 = vld [vmem:[#allocation3 + $0x14] sm:$0xf]
  %v1396 = vld [vmem:[#allocation3 + $0x18] sm:$0xf]
  %v1397 = vld [vmem:[%s5] sm:$0xf]
  %v1398 = vld [vmem:[%s5 + $0x4] sm:$0xf]
  %v1399 = vld [vmem:[%s5 + $0x8] sm:$0xf]
  %v1400 = vld [vmem:[%s5 + $0xc] sm:$0xf]
  %v1401 = vld [vmem:[%s5 + $0x10] sm:$0xf]
  %v1402 = vld [vmem:[%s5 + $0x14] sm:$0xf]
  %v1403 = vld [vmem:[%s5 + $0x18] sm:$0xf]
  %v1404 = vld [vmem:[%s5 + $0x1c] sm:$0xf]
  %v1405 = vld [vmem:[%s5 + $0x20] sm:$0xf]
  %v1406 = vld [vmem:[%s5 + $0x24] sm:$0xf]
  %v1407 = vld [vmem:[%s5 + $0x28] sm:$0xf]
  %v1408 = vld [vmem:[%s5 + $0x2c] sm:$0xf]
  %v1409 = vld [vmem:[%s5 + $0x30] sm:$0xf]
  %v1410 = vld [vmem:[%s5 + $0x34] sm:$0xf]
  %v1411 = vld [vmem:[%s5 + $0x38] sm:$0xf]
  %v1412 = vld [vmem:[%s5 + $0x3c] sm:$0xf]
  %v1420 = vunpack.c.l.b16 %v1390
  %v1421 = vunpack.c.l.b16 %v1391
  %v1422 = vunpack.c.l.b16 %v1392
  %v1423 = vunpack.c.l.b16 %v1393
  %v1424 = vunpack.c.l.b16 %v1394
  %v1425 = vunpack.c.l.b16 %v1395
  %v1426 = vunpack.c.l.b16 %v1396
  %v1427 = vpack.c.b16 %v1421, %v1420
  %v1428 = vpack.c.b16 %v1423, %v1422
  %v1429 = vpack.c.b16 %v1425, %v1424
  %v1430 = vpack.c.b16 %v1426, %v1426
  %v1451 = vunpack.c.l.b16 %v1397
  %v1452 = vunpack.c.l.b16 %v1398
  %v1453 = vunpack.c.l.b16 %v1399
  %v1454 = vunpack.c.l.b16 %v1400
  %v1455 = vunpack.c.l.b16 %v1401
  %v1456 = vunpack.c.l.b16 %v1402
  %v1457 = vunpack.c.l.b16 %v1403
  %v1458 = vunpack.c.l.b16 %v1404
  %v1459 = vunpack.c.l.b16 %v1405
  %v1460 = vunpack.c.l.b16 %v1406
  %v1461 = vunpack.c.l.b16 %v1407
  %v1462 = vunpack.c.l.b16 %v1408
  %v1463 = vunpack.c.l.b16 %v1409
  %v1464 = vunpack.c.l.b16 %v1410
  %v1465 = vunpack.c.l.b16 %v1411
  %v1466 = vunpack.c.l.b16 %v1412
  %v1467 = vpack.c.b16 %v1452, %v1451
  %v1468 = vpack.c.b16 %v1454, %v1453
  %v1469 = vpack.c.b16 %v1456, %v1455
  %v1470 = vpack.c.b16 %v1458, %v1457
  %v1471 = vpack.c.b16 %v1460, %v1459
  %v1472 = vpack.c.b16 %v1462, %v1461
  %v1473 = vpack.c.b16 %v1464, %v1463
  %v1474 = vpack.c.b16 %v1466, %v1465
  %1483 = vmatprep.subr.bf16.mxu0 0
  %1484 = vmatpush1.bf16.msra.mxu0 %v1467
  %1485 = vmatprep.subr.bf16.mxu0 0
  %1486 = vmatpush1.bf16.msra.mxu0 %v1468
  %1487 = vmatprep.subr.bf16.mxu0 0
  %1488 = vmatpush1.bf16.msra.mxu0 %v1469
  %1489 = vmatprep.subr.bf16.mxu0 0
  %1490 = vmatpush1.bf16.msra.mxu0 %v1470
  %1491 = vmatprep.subr.bf16.mxu0 0
  %1492 = vmatpush1.bf16.msra.mxu0 %v1471
  %1493 = vmatprep.subr.bf16.mxu0 0
  %1494 = vmatpush1.bf16.msra.mxu0 %v1472
  %1495 = vmatprep.subr.bf16.mxu0 0
  %1496 = vmatpush1.bf16.msra.mxu0 %v1473
  %1497 = vmatprep.subr.bf16.mxu0 0
  %1498 = vmatpush1.bf16.msra.mxu0 %v1474
  %1499 = vmatprep.subr.bf16.mxu0 0
  %1500 = vmatpush1.bf16.msra.mxu0 0
  %1501 = vmatprep.subr.bf16.mxu0 0
  %1502 = vmatpush1.bf16.msra.mxu0 0
  %1503 = vmatprep.subr.bf16.mxu0 0
  %1504 = vmatpush1.bf16.msra.mxu0 0
  %1505 = vmatprep.subr.bf16.mxu0 0
  %1506 = vmatpush1.bf16.msra.mxu0 0
  %1507 = vmatprep.subr.bf16.mxu0 0
  %1508 = vmatpush1.bf16.msra.mxu0 0
  %1509 = vmatprep.subr.bf16.mxu0 0
  %1510 = vmatpush1.bf16.msra.mxu0 0
  %1511 = vmatprep.subr.bf16.mxu0 0
  %1512 = vmatpush1.bf16.msra.mxu0 0
  %1513 = vmatprep.subr.bf16.mxu0 0
  %1514 = vmatpush1.bf16.msra.mxu0 0
  %1515 = vmatprep.mubr.bf16.mxu0 0
  %1516 = vmatmul.mubr.bf16.gmra.mrb[0].mxu0 %v1427
  %v1517 = vpop.f32.mrb[0].mxu0
  %v1518 = vadd.f32 0.0, %v1517
  %v1519 = vpop.f32.mrb[0].mxu0
  %v1520 = vpop.f32.mrb[0].mxu0
  %v1521 = vadd.f32 0.0, %v1520
  %v1522 = vpop.f32.mrb[0].mxu0
  %1523 = vmatprep.mubr.bf16.mxu0 0
  %1524 = vmatmul.mubr.bf16.gmra.mrb[0].mxu0 %v1428
  %v1525 = vpop.f32.mrb[0].mxu0
  %v1526 = vadd.f32 0.0, %v1525
  %v1527 = vpop.f32.mrb[0].mxu0
  %v1528 = vpop.f32.mrb[0].mxu0
  %v1529 = vadd.f32 0.0, %v1528
  %v1530 = vpop.f32.mrb[0].mxu0
  %1531 = vmatprep.mubr.bf16.mxu0 0
  %1532 = vmatmul.mubr.bf16.gmra.mrb[0].mxu0 %v1429
  %v1533 = vpop.f32.mrb[0].mxu0
  %v1534 = vadd.f32 0.0, %v1533
  %v1535 = vpop.f32.mrb[0].mxu0
  %v1536 = vpop.f32.mrb[0].mxu0
  %v1537 = vadd.f32 0.0, %v1536
  %v1538 = vpop.f32.mrb[0].mxu0
  %1539 = vmatprep.mubr.bf16.mxu0 0
  %1540 = vmatmul.mubr.bf16.gmra.mrb[0].mxu0 %v1430
  %v1541 = vpop.f32.mrb[0].mxu0
  %v1542 = vadd.f32 0.0, %v1541
  %v1543 = vpop.f32.mrb[0].mxu0
  %v1544 = vpop.f32.mrb[0].mxu0
  %v1545 = vpop.f32.mrb[0].mxu0
  %1546 = vdwg.mxu0
  %v1547 = vld [vmem:[%s8] sm:$0xff]
  %v1548 = vld [vmem:[%s8 + $0x8] sm:$0xff]
  %v1549 = vld [vmem:[%s8 + $0x10] sm:$0xff]
  %v1550 = vld [vmem:[%s8 + $0x18] sm:$0xff]
  %v1551 = vld [vmem:[%s8 + $0x20] sm:$0xff]
  %v1552 = vld [vmem:[%s8 + $0x28] sm:$0xff]
  %v1553 = vld [vmem:[%s8 + $0x30] sm:$0xff]
  %1555 = vset.pattern.permute.xlu0 0
  %1556 = vperm.xlu0 %1555, %v1547
  %v1557 = vpop.permute.xlu0 %1556
  %1560 = vset.pattern.permute.xlu0 0
  %1561 = vperm.xlu0 %1560, %v1548
  %v1562 = vpop.permute.xlu0 %1561
  %1565 = vset.pattern.permute.xlu0 0
  %1566 = vperm.xlu0 %1565, %v1549
  %v1567 = vpop.permute.xlu0 %1566
  %1570 = vset.pattern.permute.xlu0 0
  %1571 = vperm.xlu0 %1570, %v1550
  %v1572 = vpop.permute.xlu0 %1571
  %1575 = vset.pattern.permute.xlu0 0
  %1576 = vperm.xlu0 %1575, %v1551
  %v1577 = vpop.permute.xlu0 %1576
  %1580 = vset.pattern.permute.xlu0 0
  %1581 = vperm.xlu0 %1580, %v1552
  %v1582 = vpop.permute.xlu0 %1581
  %1585 = vset.pattern.permute.xlu0 0
  %1586 = vperm.xlu0 %1585, %v1553
  %v1587 = vpop.permute.xlu0 %1586
  %v1589 = vmul.f32 %v1518, %v1557
  %v1590 = vmul.f32 %v1521, %v1562
  %v1591 = vmul.f32 %v1526, %v1567
  %v1592 = vmul.f32 %v1529, %v1572
  %v1593 = vmul.f32 %v1534, %v1577
  %v1594 = vmul.f32 %v1537, %v1582
  %v1595 = vmul.f32 %v1542, %v1587
  %vm1596 = vcmask 130048
  %v1597 = vsel %vm1596, %v1589, 0.0
  %v1598 = vsel %vm1596, %v1590, 0.0
  %v1599 = vadd.f32 %v1597, %v1598
  %v1600 = vsel %vm1596, %v1591, 0.0
  %v1601 = vadd.f32 %v1599, %v1600
  %v1602 = vsel %vm1596, %v1592, 0.0
  %v1603 = vadd.f32 %v1601, %v1602
  %v1604 = vsel %vm1596, %v1593, 0.0
  %v1605 = vadd.f32 %v1603, %v1604
  %v1606 = vsel %vm1596, %v1594, 0.0
  %v1607 = vadd.f32 %v1605, %v1606
  %v1608 = vsel %vm1596, %v1595, 0.0
  %v1609 = vadd.f32 %v1607, %v1608
  %v1610 = vrot.slane %v1609, 4
  %v1611 = vadd.f32 %v1609, %v1610
  %v1612 = vrot.slane %v1611, 2
  %v1613 = vadd.f32 %v1611, %v1612
  %v1614 = vrot.slane %v1613, 1
  %v1615 = vadd.f32 %v1613, %v1614
  %v1616 = vmul.f32 %v1615, 0.03125
  %v1617 = vsub.f32 %v1518, %v1616
  %v1618 = vsub.f32 %v1521, %v1616
  %v1619 = vsub.f32 %v1526, %v1616
  %v1620 = vsub.f32 %v1529, %v1616
  %v1621 = vsub.f32 %v1534, %v1616
  %v1622 = vsub.f32 %v1537, %v1616
  %v1623 = vsub.f32 %v1542, %v1616
  %v1624 = vmul.f32 %v1617, %v1557
  %v1625 = vmul.f32 %v1618, %v1562
  %v1626 = vmul.f32 %v1619, %v1567
  %v1627 = vmul.f32 %v1620, %v1572
  %v1628 = vmul.f32 %v1621, %v1577
  %v1629 = vmul.f32 %v1622, %v1582
  %v1630 = vmul.f32 %v1623, %v1587
  %v1631 = vmul.f32 %v1624, %v1624
  %v1632 = vmul.f32 %v1625, %v1625
  %v1633 = vmul.f32 %v1626, %v1626
  %v1634 = vmul.f32 %v1627, %v1627
  %v1635 = vmul.f32 %v1628, %v1628
  %v1636 = vmul.f32 %v1629, %v1629
  %v1637 = vmul.f32 %v1630, %v1630
  %v1638 = vsel %vm1596, %v1631, 0.0
  %v1639 = vsel %vm1596, %v1632, 0.0
  %v1640 = vadd.f32 %v1638, %v1639
  %v1641 = vsel %vm1596, %v1633, 0.0
  %v1642 = vadd.f32 %v1640, %v1641
  %v1643 = vsel %vm1596, %v1634, 0.0
  %v1644 = vadd.f32 %v1642, %v1643
  %v1645 = vsel %vm1596, %v1635, 0.0
  %v1646 = vadd.f32 %v1644, %v1645
  %v1647 = vsel %vm1596, %v1636, 0.0
  %v1648 = vadd.f32 %v1646, %v1647
  %v1649 = vsel %vm1596, %v1637, 0.0
  %v1650 = vadd.f32 %v1648, %v1649
  %v1651 = vrot.slane %v1650, 4
  %v1652 = vadd.f32 %v1650, %v1651
  %v1653 = vrot.slane %v1652, 2
  %v1654 = vadd.f32 %v1652, %v1653
  %v1655 = vrot.slane %v1654, 1
  %v1656 = vadd.f32 %v1654, %v1655
  %v1657 = vmul.f32 %v1656, 0.03125
  %v1658 = vld [vmem:[%s6] sm:$0x1]
  %v1659 = vadd.f32 %v1657, 1e-05
  %v1660 = vrsqrt.pop %v1659
  %v1661 = vmul.f32 %v1658, %v1660
  %v1663 = vlaneseq
  %v1664 = vshrl.u32 %v1663, 7
  %v1665 = vsub.s32 0, %v1664
  %v1666 = vrot.slane %v1661, %v1665
  %v1668 = vmul.f32 %v1617, %v1666
  %v1669 = vmul.f32 %v1618, %v1666
  %v1670 = vmul.f32 %v1619, %v1666
  %v1671 = vmul.f32 %v1620, %v1666
  %v1672 = vmul.f32 %v1621, %v1666
  %v1673 = vmul.f32 %v1622, %v1666
  %v1674 = vmul.f32 %v1623, %v1666
  %v1675 = vld [vmem:[%s7] sm:$0x1]
  %v1677 = vlaneseq
  %v1678 = vshrl.u32 %v1677, 7
  %v1679 = vsub.s32 0, %v1678
  %v1680 = vrot.slane %v1675, %v1679
  %v1682 = vadd.f32 %v1668, %v1680
  %v1683 = vadd.f32 %v1669, %v1680
  %v1684 = vadd.f32 %v1670, %v1680
  %v1685 = vadd.f32 %v1671, %v1680
  %v1686 = vadd.f32 %v1672, %v1680
  %v1687 = vadd.f32 %v1673, %v1680
  %v1688 = vadd.f32 %v1674, %v1680
  %vm1689 = vcmp.gt.f32.partialorder %v1682, 0.0
  %vm1690 = vcmp.gt.f32.partialorder %v1683, 0.0
  %vm1691 = vcmp.gt.f32.partialorder %v1684, 0.0
  %vm1692 = vcmp.gt.f32.partialorder %v1685, 0.0
  %vm1693 = vcmp.gt.f32.partialorder %v1686, 0.0
  %vm1694 = vcmp.gt.f32.partialorder %v1687, 0.0
  %vm1695 = vcmp.gt.f32.partialorder %v1688, 0.0
  %v1696 = vmul.f32 %v1682, 0.2
  %v1697 = vmul.f32 %v1683, 0.2
  %v1698 = vmul.f32 %v1684, 0.2
  %v1699 = vmul.f32 %v1685, 0.2
  %v1700 = vmul.f32 %v1686, 0.2
  %v1701 = vmul.f32 %v1687, 0.2
  %v1702 = vmul.f32 %v1688, 0.2
  %v1703 = vsel %vm1689, %v1682, %v1696
  %v1704 = vsel %vm1690, %v1683, %v1697
  %v1705 = vsel %vm1691, %v1684, %v1698
  %v1706 = vsel %vm1692, %v1685, %v1699
  %v1707 = vsel %vm1693, %v1686, %v1700
  %v1708 = vsel %vm1694, %v1687, %v1701
  %v1709 = vsel %vm1695, %v1688, %v1702
  %1710 = vst.msk [vmem:[%s9] sm:$0xff] %vm1596, %v1703
  %1711 = vst.msk [vmem:[%s9 + $0x8] sm:$0xff] %vm1596, %v1704
  %1712 = vst.msk [vmem:[%s9 + $0x10] sm:$0xff] %vm1596, %v1705
  %1713 = vst.msk [vmem:[%s9 + $0x18] sm:$0xff] %vm1596, %v1706
  %1714 = vst.msk [vmem:[%s9 + $0x20] sm:$0xff] %vm1596, %v1707
  %1715 = vst.msk [vmem:[%s9 + $0x28] sm:$0xff] %vm1596, %v1708
  %1716 = vst.msk [vmem:[%s9 + $0x30] sm:$0xff] %vm1596, %v1709
  // Predicated region
  $region38: #{encoder_forward.1} parent=0 // pred_check
    _
  $region39: #{encoder_forward.1} parent=0 // pred_check_branch
    %1718 = sbr.rel (0) target = $region41
  $region40: #{encoder_forward.1} parent=0 // pred_region
    _
  $region41: #{encoder_forward.1} parent=0 // pred_fallthru
    _
  // Predicated region
  $region42: #{encoder_forward.1} parent=0 // pred_check
    _
  $region43: #{encoder_forward.1} parent=0 // pred_check_branch
    %1720 = sbr.rel (0) target = $region45
  $region44: #{encoder_forward.1} parent=0 // pred_region
    _
  $region45: #{encoder_forward.1} parent=0 // pred_fallthru
    _

</llo_original>
